<compile_context>
chip_gen: v5e
topology: v5e:2x2
jax: 0.10.0
libtpu: 0.0.40
codegen_flags: <defaults>
</compile_context>

<pallas_src>
import math
import jax
import jax.numpy as jnp
from jax.experimental import pallas as pl
from jax.experimental.pallas import tpu as pltpu

# ---------------- small synthetic RoBERTa config ----------------
BATCH = 2
SEQ = 8
HIDDEN = 32
NUM_HEADS = 4
HEAD_DIM = HIDDEN // NUM_HEADS
FFN_DIM = 64
NUM_LAYERS = 2
VOCAB = 100
NUM_RELATIONS = 5
PAD_OUT = 128          # lane-dense classifier output width (sliced to 5 outside)
PACK_W = 128           # lane width for packed small-vector operands
LN_EPS = 1e-5
NEG_INF = -1e9

# packed per-layer vector rows (in the (L, 8, PACK_W) operand)
ROW_BQKV, ROW_BO, ROW_G1, ROW_B1, ROW_FB1, ROW_FB2, ROW_G2, ROW_B2 = range(8)
# packed global vector rows (in the (4, PACK_W) operand)
GROW_EG, GROW_EB, GROW_BP, GROW_BC = range(4)


# ---------------- in-kernel helpers ----------------
def _layernorm(x, g, b):
    mu = jnp.mean(x, axis=-1, keepdims=True)
    var = jnp.mean(jnp.square(x - mu), axis=-1, keepdims=True)
    return (x - mu) * jax.lax.rsqrt(var + LN_EPS) * g + b


def _gelu(x):
    # TODO(synk): HF RoBERTa uses erf-based gelu; tanh approximation used here
    # (goes to the EUP, which is otherwise idle).
    c = 0.7978845608028654
    return 0.5 * x * (1.0 + jnp.tanh(c * (x + 0.044715 * x * x * x)))


# ---------------- fused kernel: embeddings-LN + encoder (2 layers) + pooler + classifier ----------------
def fused_kernel(x_ref, bias_ref, glob_ref,
                 wqkv_ref, wo_ref, w1_ref, w2_ref, lvec_ref,
                 wp_ref, wc_ref, out_ref):
    glob = glob_ref[...]                                   # (4, 128)
    eg = glob[GROW_EG:GROW_EG + 1, :HIDDEN]
    eb = glob[GROW_EB:GROW_EB + 1, :HIDDEN]
    bp = glob[GROW_BP:GROW_BP + 1, :HIDDEN]
    bc = glob[GROW_BC:GROW_BC + 1, :PAD_OUT]

    # embedding LayerNorm; attention bias broadcast once (hoisted out of all loops)
    x = _layernorm(x_ref[...], eg, eb)                     # (B*S, H)
    bias = bias_ref[...][:, None, :]                       # (B, 1, S)

    for l in range(NUM_LAYERS):                            # static unroll (2 layers)
        lv = lvec_ref[l]                                   # (8, 128), one load per layer
        bqkv = lv[ROW_BQKV:ROW_BQKV + 1, :3 * HIDDEN]
        bo = lv[ROW_BO:ROW_BO + 1, :HIDDEN]
        g1 = lv[ROW_G1:ROW_G1 + 1, :HIDDEN]
        b1 = lv[ROW_B1:ROW_B1 + 1, :HIDDEN]
        fb1 = lv[ROW_FB1:ROW_FB1 + 1, :FFN_DIM]
        fb2 = lv[ROW_FB2:ROW_FB2 + 1, :HIDDEN]
        g2 = lv[ROW_G2:ROW_G2 + 1, :HIDDEN]
        b2 = lv[ROW_B2:ROW_B2 + 1, :HIDDEN]

        wo_l = wo_ref[l]                                   # (H, H)

        # ---- fused QKV projection: ONE matmul per layer (scale folded into q part) ----
        qkv = jnp.dot(x, wqkv_ref[l],
                      preferred_element_type=jnp.float32) + bqkv     # (B*S, 3H)

        # ---- self-attention: heads batched over B via 3-D einsums; output
        #      projection accumulated per head via sublane row-slices of wo
        #      (no lane concat). ----
        attn_out = jnp.zeros((BATCH * SEQ, HIDDEN), jnp.float32)
        for h in range(NUM_HEADS):                         # static unroll (4 heads)
            lo = h * HEAD_DIM
            qh = qkv[:, lo:lo + HEAD_DIM].reshape(BATCH, SEQ, HEAD_DIM)
            kh = qkv[:, HIDDEN + lo:HIDDEN + lo + HEAD_DIM].reshape(BATCH, SEQ, HEAD_DIM)
            vh = qkv[:, 2 * HIDDEN + lo:2 * HIDDEN + lo + HEAD_DIM].reshape(BATCH, SEQ, HEAD_DIM)

            s = jnp.einsum('bqd,bkd->bqk', qh, kh,
                           preferred_element_type=jnp.float32) + bias
            m = jnp.max(s, axis=-1, keepdims=True)
            p = jnp.exp(s - m)
            p = p * pl.reciprocal(jnp.sum(p, axis=-1, keepdims=True), approx=True)
            ctx = jnp.einsum('bqk,bkd->bqd', p, vh,
                             preferred_element_type=jnp.float32)
            ctx2 = ctx.reshape(BATCH * SEQ, HEAD_DIM)
            attn_out = attn_out + jnp.dot(ctx2, wo_l[lo:lo + HEAD_DIM, :],
                                          preferred_element_type=jnp.float32)

        x = _layernorm(x + attn_out + bo, g1, b1)

        # ---- FFN: Linear -> GELU -> Linear -> add & LN ----
        hmid = _gelu(jnp.dot(x, w1_ref[l],
                             preferred_element_type=jnp.float32) + fb1)
        ffn_out = jnp.dot(hmid, w2_ref[l],
                          preferred_element_type=jnp.float32) + fb2
        x = _layernorm(x + ffn_out, g2, b2)

    # ---- pooler (tanh on [CLS]) + dropout(0.1)=identity + padded classifier ----
    cls = x.reshape(BATCH, SEQ, HIDDEN)[:, 0, :]           # (B, H), single strided slice
    pooled = jnp.tanh(jnp.dot(cls, wp_ref[...],
                              preferred_element_type=jnp.float32) + bp)
    out_ref[...] = (jnp.dot(pooled, wc_ref[...],
                            preferred_element_type=jnp.float32) + bc)


def fused_forward_op(emb2d, bias2d, kp):
    vm = pl.BlockSpec(memory_space=pltpu.MemorySpace.VMEM)
    return pl.pallas_call(
        fused_kernel,
        out_shape=jax.ShapeDtypeStruct((BATCH, PAD_OUT), jnp.float32),
        in_specs=[vm] * 10,
        out_specs=vm,
    )(emb2d, bias2d, kp["glob_vecs"],
      kp["wqkv"], kp["wo"], kp["w1"], kp["w2"], kp["layer_vecs"],
      kp["wp"], kp["wc_pad"])


# ---------------- parameters (deterministic synthetic init) ----------------
def init_params(key):
    def nrm(k, shape, scale=0.02):
        return (scale * jax.random.normal(k, shape)).astype(jnp.float32)

    L, H, F = NUM_LAYERS, HIDDEN, FFN_DIM
    ks = jax.random.split(key, 10)
    return {
        "tok_emb": nrm(ks[0], (VOCAB, H)),
        "pos_emb": nrm(ks[1], (SEQ, H)),
        "emb_ln_g": jnp.ones((1, H), jnp.float32),
        "emb_ln_b": jnp.zeros((1, H), jnp.float32),
        # encoder weights stacked along a leading layer axis, (in, out) layout
        "wq": nrm(ks[2], (L, H, H)), "bq": jnp.zeros((L, 1, H), jnp.float32),
        "wk": nrm(ks[3], (L, H, H)), "bk": jnp.zeros((L, 1, H), jnp.float32),
        "wv": nrm(ks[4], (L, H, H)), "bv": jnp.zeros((L, 1, H), jnp.float32),
        "wo": nrm(ks[5], (L, H, H)), "bo": jnp.zeros((L, 1, H), jnp.float32),
        "ln1_g": jnp.ones((L, 1, H), jnp.float32),
        "ln1_b": jnp.zeros((L, 1, H), jnp.float32),
        "w1": nrm(ks[6], (L, H, F)), "b1": jnp.zeros((L, 1, F), jnp.float32),
        "w2": nrm(ks[7], (L, F, H)), "b2": jnp.zeros((L, 1, H), jnp.float32),
        "ln2_g": jnp.ones((L, 1, H), jnp.float32),
        "ln2_b": jnp.zeros((L, 1, H), jnp.float32),
        # pooler + classifier
        "wp": nrm(ks[8], (H, H)), "bp": jnp.zeros((1, H), jnp.float32),
        "wc": nrm(ks[9], (H, NUM_RELATIONS)),
        "bc": jnp.zeros((1, NUM_RELATIONS), jnp.float32),
    }


# ---------------- one-time parameter prep (outside jit): fuse / fold / pack ----------------
def prepare_params(p):
    scale = 1.0 / math.sqrt(HEAD_DIM)

    # fold 1/sqrt(HEAD_DIM) into q weight/bias, fuse QKV
    wqkv = jnp.concatenate([p["wq"] * scale, p["wk"], p["wv"]], axis=-1)   # (L, H, 3H)
    bqkv = jnp.concatenate([p["bq"] * scale, p["bk"], p["bv"]], axis=-1)   # (L, 1, 3H)

    def pad3(v):   # (L, 1, w) -> (L, 1, PACK_W)
        return jnp.pad(v, ((0, 0), (0, 0), (0, PACK_W - v.shape[-1])))

    def pad2(v):   # (1, w) -> (1, PACK_W)
        return jnp.pad(v, ((0, 0), (0, PACK_W - v.shape[-1])))

    # all per-layer small vectors in one (L, 8, 128) operand
    layer_vecs = jnp.concatenate([
        pad3(bqkv), pad3(p["bo"]), pad3(p["ln1_g"]), pad3(p["ln1_b"]),
        pad3(p["b1"]), pad3(p["b2"]), pad3(p["ln2_g"]), pad3(p["ln2_b"]),
    ], axis=1)

    # lane-dense classifier weights (5 -> 128 output lanes), built ONCE here
    wc_pad = jnp.zeros((HIDDEN, PAD_OUT), jnp.float32).at[:, :NUM_RELATIONS].set(p["wc"])
    bc_pad = jnp.zeros((1, PAD_OUT), jnp.float32).at[:, :NUM_RELATIONS].set(p["bc"])

    # all global small vectors in one (4, 128) operand
    glob_vecs = jnp.concatenate(
        [pad2(p["emb_ln_g"]), pad2(p["emb_ln_b"]), pad2(p["bp"]), bc_pad], axis=0)

    return {
        "tok_emb": p["tok_emb"], "pos_emb": p["pos_emb"],
        "wqkv": wqkv, "wo": p["wo"], "w1": p["w1"], "w2": p["w2"],
        "layer_vecs": layer_vecs, "glob_vecs": glob_vecs,
        "wp": p["wp"], "wc_pad": wc_pad,
    }


# ---------------- forward (RelationExtractionModel.forward) ----------------
def relation_extraction_forward(kp, input_ids, attention_mask):
    # embedding gather + position add: plain-JAX glue.
    # TODO(synk): real RoBERTa offsets positions by padding_idx+1; synthetic here.
    tok = kp["tok_emb"][input_ids]                          # (B, S, H)
    pos = kp["pos_emb"][jnp.arange(SEQ)]                    # (S, H)
    emb2d = (tok + pos[None, :, :]).astype(jnp.float32).reshape(BATCH * SEQ, HIDDEN)

    # attention bias as (B, S); broadcast to (B, 1, S) inside the kernel
    bias2d = (1.0 - attention_mask.astype(jnp.float32)) * NEG_INF     # (B, S)

    logits_pad = fused_forward_op(emb2d, bias2d, kp)        # (B, 128)
    return logits_pad[:, :NUM_RELATIONS]


if __name__ == "__main__":
    key = jax.random.PRNGKey(0)
    pkey, ikey = jax.random.split(key)

    params = init_params(pkey)
    kparams = prepare_params(params)      # one-time fuse/fold/pack, outside jit

    input_ids = jax.random.randint(ikey, (BATCH, SEQ), 0, VOCAB, dtype=jnp.int32)
    attention_mask = jnp.array(
        [[1, 1, 1, 1, 1, 1, 1, 1],
         [1, 1, 1, 1, 1, 0, 0, 0]], dtype=jnp.int32)

    fwd = jax.jit(relation_extraction_forward)
    logits = fwd(kparams, input_ids, attention_mask)
    logits = jax.block_until_ready(logits)
    assert logits.shape == (BATCH, NUM_RELATIONS)
    assert bool(jnp.all(jnp.isfinite(logits)))
    print("KERNEL_OK")
</pallas_src>

<mosaic_0001>
module attributes {stable_mosaic.version = 11 : i64} {
  func.func @fused_kernel(%arg0: memref<16x32xf32, #tpu.memory_space<vmem>>, %arg1: memref<2x8xf32, #tpu.memory_space<vmem>>, %arg2: memref<4x128xf32, #tpu.memory_space<vmem>>, %arg3: memref<2x32x96xf32, #tpu.memory_space<vmem>>, %arg4: memref<2x32x32xf32, #tpu.memory_space<vmem>>, %arg5: memref<2x32x64xf32, #tpu.memory_space<vmem>>, %arg6: memref<2x64x32xf32, #tpu.memory_space<vmem>>, %arg7: memref<2x8x128xf32, #tpu.memory_space<vmem>>, %arg8: memref<32x32xf32, #tpu.memory_space<vmem>>, %arg9: memref<32x128xf32, #tpu.memory_space<vmem>>, %arg10: memref<2x128xf32, #tpu.memory_space<vmem>>) attributes {dimension_semantics = [], scalar_prefetch = 0 : i64, scratch_operands = 0 : i64, tpu.core_type = #tpu.core_type<tc>} {
    %c0 = arith.constant 0 : index
    %c0_0 = arith.constant 0 : index
    %0 = vector.load %arg2[%c0, %c0_0] : memref<4x128xf32, #tpu.memory_space<vmem>>, vector<4x128xf32>
    %1 = vector.extract_strided_slice %0 {offsets = [0, 0], sizes = [1, 32], strides = [1, 1]} : vector<4x128xf32> to vector<1x32xf32>
    %2 = vector.extract_strided_slice %0 {offsets = [1, 0], sizes = [1, 32], strides = [1, 1]} : vector<4x128xf32> to vector<1x32xf32>
    %3 = vector.extract_strided_slice %0 {offsets = [2, 0], sizes = [1, 32], strides = [1, 1]} : vector<4x128xf32> to vector<1x32xf32>
    %4 = vector.extract_strided_slice %0 {offsets = [3, 0], sizes = [1, 128], strides = [1, 1]} : vector<4x128xf32> to vector<1x128xf32>
    %c0_1 = arith.constant 0 : index
    %c0_2 = arith.constant 0 : index
    %5 = vector.load %arg0[%c0_1, %c0_2] : memref<16x32xf32, #tpu.memory_space<vmem>>, vector<16x32xf32>
    %cst = arith.constant dense<0.000000e+00> : vector<16xf32>
    %6 = vector.multi_reduction <add>, %5, %cst [1] : vector<16x32xf32> to vector<16xf32>
    %7 = vector.shape_cast %6 : vector<16xf32> to vector<16x1xf32>
    %cst_3 = arith.constant 3.200000e+01 : f32
    %8 = vector.broadcast %cst_3 : f32 to vector<16x1xf32>
    %9 = arith.divf %7, %8 : vector<16x1xf32>
    %10 = vector.broadcast %9 : vector<16x1xf32> to vector<16x32xf32>
    %11 = arith.subf %5, %10 : vector<16x32xf32>
    %12 = arith.mulf %11, %11 : vector<16x32xf32>
    %cst_4 = arith.constant dense<0.000000e+00> : vector<16xf32>
    %13 = vector.multi_reduction <add>, %12, %cst_4 [1] : vector<16x32xf32> to vector<16xf32>
    %14 = vector.shape_cast %13 : vector<16xf32> to vector<16x1xf32>
    %cst_5 = arith.constant 3.200000e+01 : f32
    %15 = vector.broadcast %cst_5 : f32 to vector<16x1xf32>
    %16 = arith.divf %14, %15 : vector<16x1xf32>
    %17 = vector.broadcast %9 : vector<16x1xf32> to vector<16x32xf32>
    %18 = arith.subf %5, %17 : vector<16x32xf32>
    %cst_6 = arith.constant 9.99999974E-6 : f32
    %19 = vector.broadcast %cst_6 : f32 to vector<16x1xf32>
    %20 = arith.addf %16, %19 : vector<16x1xf32>
    %21 = math.rsqrt %20 : vector<16x1xf32>
    %22 = vector.broadcast %21 : vector<16x1xf32> to vector<16x32xf32>
    %23 = arith.mulf %18, %22 : vector<16x32xf32>
    %24 = vector.broadcast %1 : vector<1x32xf32> to vector<16x32xf32>
    %25 = arith.mulf %23, %24 : vector<16x32xf32>
    %26 = vector.broadcast %2 : vector<1x32xf32> to vector<16x32xf32>
    %27 = arith.addf %25, %26 : vector<16x32xf32>
    %c0_7 = arith.constant 0 : index
    %c0_8 = arith.constant 0 : index
    %28 = vector.load %arg1[%c0_7, %c0_8] : memref<2x8xf32, #tpu.memory_space<vmem>>, vector<2x8xf32>
    %29 = vector.shape_cast %28 : vector<2x8xf32> to vector<2x1x8xf32>
    %c0_9 = arith.constant 0 : index
    %c0_10 = arith.constant 0 : index
    %c0_11 = arith.constant 0 : index
    %30 = vector.load %arg7[%c0_9, %c0_10, %c0_11] : memref<2x8x128xf32, #tpu.memory_space<vmem>>, vector<1x8x128xf32>
    %31 = vector.shape_cast %30 : vector<1x8x128xf32> to vector<8x128xf32>
    %32 = vector.extract_strided_slice %31 {offsets = [0, 0], sizes = [1, 96], strides = [1, 1]} : vector<8x128xf32> to vector<1x96xf32>
    %33 = vector.extract_strided_slice %31 {offsets = [1, 0], sizes = [1, 32], strides = [1, 1]} : vector<8x128xf32> to vector<1x32xf32>
    %34 = vector.extract_strided_slice %31 {offsets = [2, 0], sizes = [1, 32], strides = [1, 1]} : vector<8x128xf32> to vector<1x32xf32>
    %35 = vector.extract_strided_slice %31 {offsets = [3, 0], sizes = [1, 32], strides = [1, 1]} : vector<8x128xf32> to vector<1x32xf32>
    %36 = vector.extract_strided_slice %31 {offsets = [4, 0], sizes = [1, 64], strides = [1, 1]} : vector<8x128xf32> to vector<1x64xf32>
    %37 = vector.extract_strided_slice %31 {offsets = [5, 0], sizes = [1, 32], strides = [1, 1]} : vector<8x128xf32> to vector<1x32xf32>
    %38 = vector.extract_strided_slice %31 {offsets = [6, 0], sizes = [1, 32], strides = [1, 1]} : vector<8x128xf32> to vector<1x32xf32>
    %39 = vector.extract_strided_slice %31 {offsets = [7, 0], sizes = [1, 32], strides = [1, 1]} : vector<8x128xf32> to vector<1x32xf32>
    %c0_12 = arith.constant 0 : index
    %c0_13 = arith.constant 0 : index
    %c0_14 = arith.constant 0 : index
    %40 = vector.load %arg4[%c0_12, %c0_13, %c0_14] : memref<2x32x32xf32, #tpu.memory_space<vmem>>, vector<1x32x32xf32>
    %41 = vector.shape_cast %40 : vector<1x32x32xf32> to vector<32x32xf32>
    %c0_15 = arith.constant 0 : index
    %c0_16 = arith.constant 0 : index
    %c0_17 = arith.constant 0 : index
    %42 = vector.load %arg3[%c0_15, %c0_16, %c0_17] : memref<2x32x96xf32, #tpu.memory_space<vmem>>, vector<1x32x96xf32>
    %43 = vector.shape_cast %42 : vector<1x32x96xf32> to vector<32x96xf32>
    %cst_18 = arith.constant dense<0.000000e+00> : vector<16x96xf32>
    %44 = tpu.matmul %27, %43, %cst_18 {dimension_numbers = #tpu.dot_dimension_numbers<[1], [0], [0], [1], [0, 0, 1, 1], [], []>} : vector<16x32xf32>, vector<32x96xf32>, vector<16x96xf32> -> vector<16x96xf32>
    %45 = vector.broadcast %32 : vector<1x96xf32> to vector<16x96xf32>
    %46 = arith.addf %44, %45 : vector<16x96xf32>
    %cst_19 = arith.constant 0.000000e+00 : f32
    %47 = vector.broadcast %cst_19 : f32 to vector<16x32xf32>
    %48 = vector.extract_strided_slice %46 {offsets = [0, 0], sizes = [16, 8], strides = [1, 1]} : vector<16x96xf32> to vector<16x8xf32>
    %49 = vector.shape_cast %48 : vector<16x8xf32> to vector<2x8x8xf32>
    %50 = vector.extract_strided_slice %46 {offsets = [0, 32], sizes = [16, 8], strides = [1, 1]} : vector<16x96xf32> to vector<16x8xf32>
    %51 = vector.shape_cast %50 : vector<16x8xf32> to vector<2x8x8xf32>
    %52 = vector.extract_strided_slice %46 {offsets = [0, 64], sizes = [16, 8], strides = [1, 1]} : vector<16x96xf32> to vector<16x8xf32>
    %53 = vector.shape_cast %52 : vector<16x8xf32> to vector<2x8x8xf32>
    "tpu.trace_start"() <{level = 10 : i32, message = "bqd,bkd->bqk"}> : () -> ()
    %cst_20 = arith.constant dense<0.000000e+00> : vector<2x8x8xf32>
    %54 = tpu.matmul %49, %51, %cst_20 {dimension_numbers = #tpu.dot_dimension_numbers<[2], [2], [1], [1], [0, 0, 0, 1, 1, 1], [0], [0]>} : vector<2x8x8xf32>, vector<2x8x8xf32>, vector<2x8x8xf32> -> vector<2x8x8xf32>
    "tpu.trace_stop"() : () -> ()
    %55 = vector.broadcast %29 : vector<2x1x8xf32> to vector<2x8x8xf32>
    %56 = arith.addf %54, %55 : vector<2x8x8xf32>
    %cst_21 = arith.constant dense<0xFF800000> : vector<2x8xf32>
    %57 = vector.multi_reduction <maximumf>, %56, %cst_21 [2] : vector<2x8x8xf32> to vector<2x8xf32>
    %58 = vector.shape_cast %57 : vector<2x8xf32> to vector<2x8x1xf32>
    %59 = vector.broadcast %58 : vector<2x8x1xf32> to vector<2x8x8xf32>
    %60 = arith.subf %56, %59 : vector<2x8x8xf32>
    %61 = math.exp %60 : vector<2x8x8xf32>
    %cst_22 = arith.constant dense<0.000000e+00> : vector<2x8xf32>
    %62 = vector.multi_reduction <add>, %61, %cst_22 [2] : vector<2x8x8xf32> to vector<2x8xf32>
    %63 = vector.shape_cast %62 : vector<2x8xf32> to vector<2x8x1xf32>
    %64 = tpu.reciprocal %63 {approx = true} : vector<2x8x1xf32> -> vector<2x8x1xf32>
    %65 = vector.broadcast %64 : vector<2x8x1xf32> to vector<2x8x8xf32>
    %66 = arith.mulf %61, %65 : vector<2x8x8xf32>
    "tpu.trace_start"() <{level = 10 : i32, message = "bqk,bkd->bqd"}> : () -> ()
    %cst_23 = arith.constant dense<0.000000e+00> : vector<2x8x8xf32>
    %67 = tpu.matmul %66, %53, %cst_23 {dimension_numbers = #tpu.dot_dimension_numbers<[2], [1], [1], [2], [0, 0, 0, 1, 1, 2], [0], [0]>} : vector<2x8x8xf32>, vector<2x8x8xf32>, vector<2x8x8xf32> -> vector<2x8x8xf32>
    "tpu.trace_stop"() : () -> ()
    %68 = vector.shape_cast %67 : vector<2x8x8xf32> to vector<16x8xf32>
    %69 = vector.extract_strided_slice %41 {offsets = [0, 0], sizes = [8, 32], strides = [1, 1]} : vector<32x32xf32> to vector<8x32xf32>
    %cst_24 = arith.constant dense<0.000000e+00> : vector<16x32xf32>
    %70 = tpu.matmul %68, %69, %cst_24 {dimension_numbers = #tpu.dot_dimension_numbers<[1], [0], [0], [1], [0, 0, 1, 1], [], []>} : vector<16x8xf32>, vector<8x32xf32>, vector<16x32xf32> -> vector<16x32xf32>
    %71 = arith.addf %47, %70 : vector<16x32xf32>
    %72 = vector.extract_strided_slice %46 {offsets = [0, 8], sizes = [16, 8], strides = [1, 1]} : vector<16x96xf32> to vector<16x8xf32>
    %73 = vector.shape_cast %72 : vector<16x8xf32> to vector<2x8x8xf32>
    %74 = vector.extract_strided_slice %46 {offsets = [0, 40], sizes = [16, 8], strides = [1, 1]} : vector<16x96xf32> to vector<16x8xf32>
    %75 = vector.shape_cast %74 : vector<16x8xf32> to vector<2x8x8xf32>
    %76 = vector.extract_strided_slice %46 {offsets = [0, 72], sizes = [16, 8], strides = [1, 1]} : vector<16x96xf32> to vector<16x8xf32>
    %77 = vector.shape_cast %76 : vector<16x8xf32> to vector<2x8x8xf32>
    "tpu.trace_start"() <{level = 10 : i32, message = "bqd,bkd->bqk"}> : () -> ()
    %cst_25 = arith.constant dense<0.000000e+00> : vector<2x8x8xf32>
    %78 = tpu.matmul %73, %75, %cst_25 {dimension_numbers = #tpu.dot_dimension_numbers<[2], [2], [1], [1], [0, 0, 0, 1, 1, 1], [0], [0]>} : vector<2x8x8xf32>, vector<2x8x8xf32>, vector<2x8x8xf32> -> vector<2x8x8xf32>
    "tpu.trace_stop"() : () -> ()
    %79 = vector.broadcast %29 : vector<2x1x8xf32> to vector<2x8x8xf32>
    %80 = arith.addf %78, %79 : vector<2x8x8xf32>
    %cst_26 = arith.constant dense<0xFF800000> : vector<2x8xf32>
    %81 = vector.multi_reduction <maximumf>, %80, %cst_26 [2] : vector<2x8x8xf32> to vector<2x8xf32>
    %82 = vector.shape_cast %81 : vector<2x8xf32> to vector<2x8x1xf32>
    %83 = vector.broadcast %82 : vector<2x8x1xf32> to vector<2x8x8xf32>
    %84 = arith.subf %80, %83 : vector<2x8x8xf32>
    %85 = math.exp %84 : vector<2x8x8xf32>
    %cst_27 = arith.constant dense<0.000000e+00> : vector<2x8xf32>
    %86 = vector.multi_reduction <add>, %85, %cst_27 [2] : vector<2x8x8xf32> to vector<2x8xf32>
    %87 = vector.shape_cast %86 : vector<2x8xf32> to vector<2x8x1xf32>
    %88 = tpu.reciprocal %87 {approx = true} : vector<2x8x1xf32> -> vector<2x8x1xf32>
    %89 = vector.broadcast %88 : vector<2x8x1xf32> to vector<2x8x8xf32>
    %90 = arith.mulf %85, %89 : vector<2x8x8xf32>
    "tpu.trace_start"() <{level = 10 : i32, message = "bqk,bkd->bqd"}> : () -> ()
    %cst_28 = arith.constant dense<0.000000e+00> : vector<2x8x8xf32>
    %91 = tpu.matmul %90, %77, %cst_28 {dimension_numbers = #tpu.dot_dimension_numbers<[2], [1], [1], [2], [0, 0, 0, 1, 1, 2], [0], [0]>} : vector<2x8x8xf32>, vector<2x8x8xf32>, vector<2x8x8xf32> -> vector<2x8x8xf32>
    "tpu.trace_stop"() : () -> ()
    %92 = vector.shape_cast %91 : vector<2x8x8xf32> to vector<16x8xf32>
    %93 = vector.extract_strided_slice %41 {offsets = [8, 0], sizes = [8, 32], strides = [1, 1]} : vector<32x32xf32> to vector<8x32xf32>
    %cst_29 = arith.constant dense<0.000000e+00> : vector<16x32xf32>
    %94 = tpu.matmul %92, %93, %cst_29 {dimension_numbers = #tpu.dot_dimension_numbers<[1], [0], [0], [1], [0, 0, 1, 1], [], []>} : vector<16x8xf32>, vector<8x32xf32>, vector<16x32xf32> -> vector<16x32xf32>
    %95 = arith.addf %71, %94 : vector<16x32xf32>
    %96 = vector.extract_strided_slice %46 {offsets = [0, 16], sizes = [16, 8], strides = [1, 1]} : vector<16x96xf32> to vector<16x8xf32>
    %97 = vector.shape_cast %96 : vector<16x8xf32> to vector<2x8x8xf32>
    %98 = vector.extract_strided_slice %46 {offsets = [0, 48], sizes = [16, 8], strides = [1, 1]} : vector<16x96xf32> to vector<16x8xf32>
    %99 = vector.shape_cast %98 : vector<16x8xf32> to vector<2x8x8xf32>
    %100 = vector.extract_strided_slice %46 {offsets = [0, 80], sizes = [16, 8], strides = [1, 1]} : vector<16x96xf32> to vector<16x8xf32>
    %101 = vector.shape_cast %100 : vector<16x8xf32> to vector<2x8x8xf32>
    "tpu.trace_start"() <{level = 10 : i32, message = "bqd,bkd->bqk"}> : () -> ()
    %cst_30 = arith.constant dense<0.000000e+00> : vector<2x8x8xf32>
    %102 = tpu.matmul %97, %99, %cst_30 {dimension_numbers = #tpu.dot_dimension_numbers<[2], [2], [1], [1], [0, 0, 0, 1, 1, 1], [0], [0]>} : vector<2x8x8xf32>, vector<2x8x8xf32>, vector<2x8x8xf32> -> vector<2x8x8xf32>
    "tpu.trace_stop"() : () -> ()
    %103 = vector.broadcast %29 : vector<2x1x8xf32> to vector<2x8x8xf32>
    %104 = arith.addf %102, %103 : vector<2x8x8xf32>
    %cst_31 = arith.constant dense<0xFF800000> : vector<2x8xf32>
    %105 = vector.multi_reduction <maximumf>, %104, %cst_31 [2] : vector<2x8x8xf32> to vector<2x8xf32>
    %106 = vector.shape_cast %105 : vector<2x8xf32> to vector<2x8x1xf32>
    %107 = vector.broadcast %106 : vector<2x8x1xf32> to vector<2x8x8xf32>
    %108 = arith.subf %104, %107 : vector<2x8x8xf32>
    %109 = math.exp %108 : vector<2x8x8xf32>
    %cst_32 = arith.constant dense<0.000000e+00> : vector<2x8xf32>
    %110 = vector.multi_reduction <add>, %109, %cst_32 [2] : vector<2x8x8xf32> to vector<2x8xf32>
    %111 = vector.shape_cast %110 : vector<2x8xf32> to vector<2x8x1xf32>
    %112 = tpu.reciprocal %111 {approx = true} : vector<2x8x1xf32> -> vector<2x8x1xf32>
    %113 = vector.broadcast %112 : vector<2x8x1xf32> to vector<2x8x8xf32>
    %114 = arith.mulf %109, %113 : vector<2x8x8xf32>
    "tpu.trace_start"() <{level = 10 : i32, message = "bqk,bkd->bqd"}> : () -> ()
    %cst_33 = arith.constant dense<0.000000e+00> : vector<2x8x8xf32>
    %115 = tpu.matmul %114, %101, %cst_33 {dimension_numbers = #tpu.dot_dimension_numbers<[2], [1], [1], [2], [0, 0, 0, 1, 1, 2], [0], [0]>} : vector<2x8x8xf32>, vector<2x8x8xf32>, vector<2x8x8xf32> -> vector<2x8x8xf32>
    "tpu.trace_stop"() : () -> ()
    %116 = vector.shape_cast %115 : vector<2x8x8xf32> to vector<16x8xf32>
    %117 = vector.extract_strided_slice %41 {offsets = [16, 0], sizes = [8, 32], strides = [1, 1]} : vector<32x32xf32> to vector<8x32xf32>
    %cst_34 = arith.constant dense<0.000000e+00> : vector<16x32xf32>
    %118 = tpu.matmul %116, %117, %cst_34 {dimension_numbers = #tpu.dot_dimension_numbers<[1], [0], [0], [1], [0, 0, 1, 1], [], []>} : vector<16x8xf32>, vector<8x32xf32>, vector<16x32xf32> -> vector<16x32xf32>
    %119 = arith.addf %95, %118 : vector<16x32xf32>
    %120 = vector.extract_strided_slice %46 {offsets = [0, 24], sizes = [16, 8], strides = [1, 1]} : vector<16x96xf32> to vector<16x8xf32>
    %121 = vector.shape_cast %120 : vector<16x8xf32> to vector<2x8x8xf32>
    %122 = vector.extract_strided_slice %46 {offsets = [0, 56], sizes = [16, 8], strides = [1, 1]} : vector<16x96xf32> to vector<16x8xf32>
    %123 = vector.shape_cast %122 : vector<16x8xf32> to vector<2x8x8xf32>
    %124 = vector.extract_strided_slice %46 {offsets = [0, 88], sizes = [16, 8], strides = [1, 1]} : vector<16x96xf32> to vector<16x8xf32>
    %125 = vector.shape_cast %124 : vector<16x8xf32> to vector<2x8x8xf32>
    "tpu.trace_start"() <{level = 10 : i32, message = "bqd,bkd->bqk"}> : () -> ()
    %cst_35 = arith.constant dense<0.000000e+00> : vector<2x8x8xf32>
    %126 = tpu.matmul %121, %123, %cst_35 {dimension_numbers = #tpu.dot_dimension_numbers<[2], [2], [1], [1], [0, 0, 0, 1, 1, 1], [0], [0]>} : vector<2x8x8xf32>, vector<2x8x8xf32>, vector<2x8x8xf32> -> vector<2x8x8xf32>
    "tpu.trace_stop"() : () -> ()
    %127 = vector.broadcast %29 : vector<2x1x8xf32> to vector<2x8x8xf32>
    %128 = arith.addf %126, %127 : vector<2x8x8xf32>
    %cst_36 = arith.constant dense<0xFF800000> : vector<2x8xf32>
    %129 = vector.multi_reduction <maximumf>, %128, %cst_36 [2] : vector<2x8x8xf32> to vector<2x8xf32>
    %130 = vector.shape_cast %129 : vector<2x8xf32> to vector<2x8x1xf32>
    %131 = vector.broadcast %130 : vector<2x8x1xf32> to vector<2x8x8xf32>
    %132 = arith.subf %128, %131 : vector<2x8x8xf32>
    %133 = math.exp %132 : vector<2x8x8xf32>
    %cst_37 = arith.constant dense<0.000000e+00> : vector<2x8xf32>
    %134 = vector.multi_reduction <add>, %133, %cst_37 [2] : vector<2x8x8xf32> to vector<2x8xf32>
    %135 = vector.shape_cast %134 : vector<2x8xf32> to vector<2x8x1xf32>
    %136 = tpu.reciprocal %135 {approx = true} : vector<2x8x1xf32> -> vector<2x8x1xf32>
    %137 = vector.broadcast %136 : vector<2x8x1xf32> to vector<2x8x8xf32>
    %138 = arith.mulf %133, %137 : vector<2x8x8xf32>
    "tpu.trace_start"() <{level = 10 : i32, message = "bqk,bkd->bqd"}> : () -> ()
    %cst_38 = arith.constant dense<0.000000e+00> : vector<2x8x8xf32>
    %139 = tpu.matmul %138, %125, %cst_38 {dimension_numbers = #tpu.dot_dimension_numbers<[2], [1], [1], [2], [0, 0, 0, 1, 1, 2], [0], [0]>} : vector<2x8x8xf32>, vector<2x8x8xf32>, vector<2x8x8xf32> -> vector<2x8x8xf32>
    "tpu.trace_stop"() : () -> ()
    %140 = vector.shape_cast %139 : vector<2x8x8xf32> to vector<16x8xf32>
    %141 = vector.extract_strided_slice %41 {offsets = [24, 0], sizes = [8, 32], strides = [1, 1]} : vector<32x32xf32> to vector<8x32xf32>
    %cst_39 = arith.constant dense<0.000000e+00> : vector<16x32xf32>
    %142 = tpu.matmul %140, %141, %cst_39 {dimension_numbers = #tpu.dot_dimension_numbers<[1], [0], [0], [1], [0, 0, 1, 1], [], []>} : vector<16x8xf32>, vector<8x32xf32>, vector<16x32xf32> -> vector<16x32xf32>
    %143 = arith.addf %119, %142 : vector<16x32xf32>
    %144 = arith.addf %27, %143 : vector<16x32xf32>
    %145 = vector.broadcast %33 : vector<1x32xf32> to vector<16x32xf32>
    %146 = arith.addf %144, %145 : vector<16x32xf32>
    %cst_40 = arith.constant dense<0.000000e+00> : vector<16xf32>
    %147 = vector.multi_reduction <add>, %146, %cst_40 [1] : vector<16x32xf32> to vector<16xf32>
    %148 = vector.shape_cast %147 : vector<16xf32> to vector<16x1xf32>
    %cst_41 = arith.constant 3.200000e+01 : f32
    %149 = vector.broadcast %cst_41 : f32 to vector<16x1xf32>
    %150 = arith.divf %148, %149 : vector<16x1xf32>
    %151 = vector.broadcast %150 : vector<16x1xf32> to vector<16x32xf32>
    %152 = arith.subf %146, %151 : vector<16x32xf32>
    %153 = arith.mulf %152, %152 : vector<16x32xf32>
    %cst_42 = arith.constant dense<0.000000e+00> : vector<16xf32>
    %154 = vector.multi_reduction <add>, %153, %cst_42 [1] : vector<16x32xf32> to vector<16xf32>
    %155 = vector.shape_cast %154 : vector<16xf32> to vector<16x1xf32>
    %cst_43 = arith.constant 3.200000e+01 : f32
    %156 = vector.broadcast %cst_43 : f32 to vector<16x1xf32>
    %157 = arith.divf %155, %156 : vector<16x1xf32>
    %158 = vector.broadcast %150 : vector<16x1xf32> to vector<16x32xf32>
    %159 = arith.subf %146, %158 : vector<16x32xf32>
    %cst_44 = arith.constant 9.99999974E-6 : f32
    %160 = vector.broadcast %cst_44 : f32 to vector<16x1xf32>
    %161 = arith.addf %157, %160 : vector<16x1xf32>
    %162 = math.rsqrt %161 : vector<16x1xf32>
    %163 = vector.broadcast %162 : vector<16x1xf32> to vector<16x32xf32>
    %164 = arith.mulf %159, %163 : vector<16x32xf32>
    %165 = vector.broadcast %34 : vector<1x32xf32> to vector<16x32xf32>
    %166 = arith.mulf %164, %165 : vector<16x32xf32>
    %167 = vector.broadcast %35 : vector<1x32xf32> to vector<16x32xf32>
    %168 = arith.addf %166, %167 : vector<16x32xf32>
    %c0_45 = arith.constant 0 : index
    %c0_46 = arith.constant 0 : index
    %c0_47 = arith.constant 0 : index
    %169 = vector.load %arg5[%c0_45, %c0_46, %c0_47] : memref<2x32x64xf32, #tpu.memory_space<vmem>>, vector<1x32x64xf32>
    %170 = vector.shape_cast %169 : vector<1x32x64xf32> to vector<32x64xf32>
    %cst_48 = arith.constant dense<0.000000e+00> : vector<16x64xf32>
    %171 = tpu.matmul %168, %170, %cst_48 {dimension_numbers = #tpu.dot_dimension_numbers<[1], [0], [0], [1], [0, 0, 1, 1], [], []>} : vector<16x32xf32>, vector<32x64xf32>, vector<16x64xf32> -> vector<16x64xf32>
    %172 = vector.broadcast %36 : vector<1x64xf32> to vector<16x64xf32>
    %173 = arith.addf %171, %172 : vector<16x64xf32>
    %cst_49 = arith.constant 5.000000e-01 : f32
    %174 = vector.broadcast %cst_49 : f32 to vector<16x64xf32>
    %175 = arith.mulf %174, %173 : vector<16x64xf32>
    %cst_50 = arith.constant 4.471500e-02 : f32
    %176 = vector.broadcast %cst_50 : f32 to vector<16x64xf32>
    %177 = arith.mulf %176, %173 : vector<16x64xf32>
    %178 = arith.mulf %177, %173 : vector<16x64xf32>
    %179 = arith.mulf %178, %173 : vector<16x64xf32>
    %180 = arith.addf %173, %179 : vector<16x64xf32>
    %cst_51 = arith.constant 0.797884583 : f32
    %181 = vector.broadcast %cst_51 : f32 to vector<16x64xf32>
    %182 = arith.mulf %181, %180 : vector<16x64xf32>
    %183 = math.tanh %182 : vector<16x64xf32>
    %cst_52 = arith.constant 1.000000e+00 : f32
    %184 = vector.broadcast %cst_52 : f32 to vector<16x64xf32>
    %185 = arith.addf %184, %183 : vector<16x64xf32>
    %186 = arith.mulf %175, %185 : vector<16x64xf32>
    %c0_53 = arith.constant 0 : index
    %c0_54 = arith.constant 0 : index
    %c0_55 = arith.constant 0 : index
    %187 = vector.load %arg6[%c0_53, %c0_54, %c0_55] : memref<2x64x32xf32, #tpu.memory_space<vmem>>, vector<1x64x32xf32>
    %188 = vector.shape_cast %187 : vector<1x64x32xf32> to vector<64x32xf32>
    %cst_56 = arith.constant dense<0.000000e+00> : vector<16x32xf32>
    %189 = tpu.matmul %186, %188, %cst_56 {dimension_numbers = #tpu.dot_dimension_numbers<[1], [0], [0], [1], [0, 0, 1, 1], [], []>} : vector<16x64xf32>, vector<64x32xf32>, vector<16x32xf32> -> vector<16x32xf32>
    %190 = vector.broadcast %37 : vector<1x32xf32> to vector<16x32xf32>
    %191 = arith.addf %189, %190 : vector<16x32xf32>
    %192 = arith.addf %168, %191 : vector<16x32xf32>
    %cst_57 = arith.constant dense<0.000000e+00> : vector<16xf32>
    %193 = vector.multi_reduction <add>, %192, %cst_57 [1] : vector<16x32xf32> to vector<16xf32>
    %194 = vector.shape_cast %193 : vector<16xf32> to vector<16x1xf32>
    %cst_58 = arith.constant 3.200000e+01 : f32
    %195 = vector.broadcast %cst_58 : f32 to vector<16x1xf32>
    %196 = arith.divf %194, %195 : vector<16x1xf32>
    %197 = vector.broadcast %196 : vector<16x1xf32> to vector<16x32xf32>
    %198 = arith.subf %192, %197 : vector<16x32xf32>
    %199 = arith.mulf %198, %198 : vector<16x32xf32>
    %cst_59 = arith.constant dense<0.000000e+00> : vector<16xf32>
    %200 = vector.multi_reduction <add>, %199, %cst_59 [1] : vector<16x32xf32> to vector<16xf32>
    %201 = vector.shape_cast %200 : vector<16xf32> to vector<16x1xf32>
    %cst_60 = arith.constant 3.200000e+01 : f32
    %202 = vector.broadcast %cst_60 : f32 to vector<16x1xf32>
    %203 = arith.divf %201, %202 : vector<16x1xf32>
    %204 = vector.broadcast %196 : vector<16x1xf32> to vector<16x32xf32>
    %205 = arith.subf %192, %204 : vector<16x32xf32>
    %cst_61 = arith.constant 9.99999974E-6 : f32
    %206 = vector.broadcast %cst_61 : f32 to vector<16x1xf32>
    %207 = arith.addf %203, %206 : vector<16x1xf32>
    %208 = math.rsqrt %207 : vector<16x1xf32>
    %209 = vector.broadcast %208 : vector<16x1xf32> to vector<16x32xf32>
    %210 = arith.mulf %205, %209 : vector<16x32xf32>
    %211 = vector.broadcast %38 : vector<1x32xf32> to vector<16x32xf32>
    %212 = arith.mulf %210, %211 : vector<16x32xf32>
    %213 = vector.broadcast %39 : vector<1x32xf32> to vector<16x32xf32>
    %214 = arith.addf %212, %213 : vector<16x32xf32>
    %c1 = arith.constant 1 : index
    %c0_62 = arith.constant 0 : index
    %c0_63 = arith.constant 0 : index
    %215 = vector.load %arg7[%c1, %c0_62, %c0_63] : memref<2x8x128xf32, #tpu.memory_space<vmem>>, vector<1x8x128xf32>
    %216 = vector.shape_cast %215 : vector<1x8x128xf32> to vector<8x128xf32>
    %217 = vector.extract_strided_slice %216 {offsets = [0, 0], sizes = [1, 96], strides = [1, 1]} : vector<8x128xf32> to vector<1x96xf32>
    %218 = vector.extract_strided_slice %216 {offsets = [1, 0], sizes = [1, 32], strides = [1, 1]} : vector<8x128xf32> to vector<1x32xf32>
    %219 = vector.extract_strided_slice %216 {offsets = [2, 0], sizes = [1, 32], strides = [1, 1]} : vector<8x128xf32> to vector<1x32xf32>
    %220 = vector.extract_strided_slice %216 {offsets = [3, 0], sizes = [1, 32], strides = [1, 1]} : vector<8x128xf32> to vector<1x32xf32>
    %221 = vector.extract_strided_slice %216 {offsets = [4, 0], sizes = [1, 64], strides = [1, 1]} : vector<8x128xf32> to vector<1x64xf32>
    %222 = vector.extract_strided_slice %216 {offsets = [5, 0], sizes = [1, 32], strides = [1, 1]} : vector<8x128xf32> to vector<1x32xf32>
    %223 = vector.extract_strided_slice %216 {offsets = [6, 0], sizes = [1, 32], strides = [1, 1]} : vector<8x128xf32> to vector<1x32xf32>
    %224 = vector.extract_strided_slice %216 {offsets = [7, 0], sizes = [1, 32], strides = [1, 1]} : vector<8x128xf32> to vector<1x32xf32>
    %c1_64 = arith.constant 1 : index
    %c0_65 = arith.constant 0 : index
    %c0_66 = arith.constant 0 : index
    %225 = vector.load %arg4[%c1_64, %c0_65, %c0_66] : memref<2x32x32xf32, #tpu.memory_space<vmem>>, vector<1x32x32xf32>
    %226 = vector.shape_cast %225 : vector<1x32x32xf32> to vector<32x32xf32>
    %c1_67 = arith.constant 1 : index
    %c0_68 = arith.constant 0 : index
    %c0_69 = arith.constant 0 : index
    %227 = vector.load %arg3[%c1_67, %c0_68, %c0_69] : memref<2x32x96xf32, #tpu.memory_space<vmem>>, vector<1x32x96xf32>
    %228 = vector.shape_cast %227 : vector<1x32x96xf32> to vector<32x96xf32>
    %cst_70 = arith.constant dense<0.000000e+00> : vector<16x96xf32>
    %229 = tpu.matmul %214, %228, %cst_70 {dimension_numbers = #tpu.dot_dimension_numbers<[1], [0], [0], [1], [0, 0, 1, 1], [], []>} : vector<16x32xf32>, vector<32x96xf32>, vector<16x96xf32> -> vector<16x96xf32>
    %230 = vector.broadcast %217 : vector<1x96xf32> to vector<16x96xf32>
    %231 = arith.addf %229, %230 : vector<16x96xf32>
    %cst_71 = arith.constant 0.000000e+00 : f32
    %232 = vector.broadcast %cst_71 : f32 to vector<16x32xf32>
    %233 = vector.extract_strided_slice %231 {offsets = [0, 0], sizes = [16, 8], strides = [1, 1]} : vector<16x96xf32> to vector<16x8xf32>
    %234 = vector.shape_cast %233 : vector<16x8xf32> to vector<2x8x8xf32>
    %235 = vector.extract_strided_slice %231 {offsets = [0, 32], sizes = [16, 8], strides = [1, 1]} : vector<16x96xf32> to vector<16x8xf32>
    %236 = vector.shape_cast %235 : vector<16x8xf32> to vector<2x8x8xf32>
    %237 = vector.extract_strided_slice %231 {offsets = [0, 64], sizes = [16, 8], strides = [1, 1]} : vector<16x96xf32> to vector<16x8xf32>
    %238 = vector.shape_cast %237 : vector<16x8xf32> to vector<2x8x8xf32>
    "tpu.trace_start"() <{level = 10 : i32, message = "bqd,bkd->bqk"}> : () -> ()
    %cst_72 = arith.constant dense<0.000000e+00> : vector<2x8x8xf32>
    %239 = tpu.matmul %234, %236, %cst_72 {dimension_numbers = #tpu.dot_dimension_numbers<[2], [2], [1], [1], [0, 0, 0, 1, 1, 1], [0], [0]>} : vector<2x8x8xf32>, vector<2x8x8xf32>, vector<2x8x8xf32> -> vector<2x8x8xf32>
    "tpu.trace_stop"() : () -> ()
    %240 = vector.broadcast %29 : vector<2x1x8xf32> to vector<2x8x8xf32>
    %241 = arith.addf %239, %240 : vector<2x8x8xf32>
    %cst_73 = arith.constant dense<0xFF800000> : vector<2x8xf32>
    %242 = vector.multi_reduction <maximumf>, %241, %cst_73 [2] : vector<2x8x8xf32> to vector<2x8xf32>
    %243 = vector.shape_cast %242 : vector<2x8xf32> to vector<2x8x1xf32>
    %244 = vector.broadcast %243 : vector<2x8x1xf32> to vector<2x8x8xf32>
    %245 = arith.subf %241, %244 : vector<2x8x8xf32>
    %246 = math.exp %245 : vector<2x8x8xf32>
    %cst_74 = arith.constant dense<0.000000e+00> : vector<2x8xf32>
    %247 = vector.multi_reduction <add>, %246, %cst_74 [2] : vector<2x8x8xf32> to vector<2x8xf32>
    %248 = vector.shape_cast %247 : vector<2x8xf32> to vector<2x8x1xf32>
    %249 = tpu.reciprocal %248 {approx = true} : vector<2x8x1xf32> -> vector<2x8x1xf32>
    %250 = vector.broadcast %249 : vector<2x8x1xf32> to vector<2x8x8xf32>
    %251 = arith.mulf %246, %250 : vector<2x8x8xf32>
    "tpu.trace_start"() <{level = 10 : i32, message = "bqk,bkd->bqd"}> : () -> ()
    %cst_75 = arith.constant dense<0.000000e+00> : vector<2x8x8xf32>
    %252 = tpu.matmul %251, %238, %cst_75 {dimension_numbers = #tpu.dot_dimension_numbers<[2], [1], [1], [2], [0, 0, 0, 1, 1, 2], [0], [0]>} : vector<2x8x8xf32>, vector<2x8x8xf32>, vector<2x8x8xf32> -> vector<2x8x8xf32>
    "tpu.trace_stop"() : () -> ()
    %253 = vector.shape_cast %252 : vector<2x8x8xf32> to vector<16x8xf32>
    %254 = vector.extract_strided_slice %226 {offsets = [0, 0], sizes = [8, 32], strides = [1, 1]} : vector<32x32xf32> to vector<8x32xf32>
    %cst_76 = arith.constant dense<0.000000e+00> : vector<16x32xf32>
    %255 = tpu.matmul %253, %254, %cst_76 {dimension_numbers = #tpu.dot_dimension_numbers<[1], [0], [0], [1], [0, 0, 1, 1], [], []>} : vector<16x8xf32>, vector<8x32xf32>, vector<16x32xf32> -> vector<16x32xf32>
    %256 = arith.addf %232, %255 : vector<16x32xf32>
    %257 = vector.extract_strided_slice %231 {offsets = [0, 8], sizes = [16, 8], strides = [1, 1]} : vector<16x96xf32> to vector<16x8xf32>
    %258 = vector.shape_cast %257 : vector<16x8xf32> to vector<2x8x8xf32>
    %259 = vector.extract_strided_slice %231 {offsets = [0, 40], sizes = [16, 8], strides = [1, 1]} : vector<16x96xf32> to vector<16x8xf32>
    %260 = vector.shape_cast %259 : vector<16x8xf32> to vector<2x8x8xf32>
    %261 = vector.extract_strided_slice %231 {offsets = [0, 72], sizes = [16, 8], strides = [1, 1]} : vector<16x96xf32> to vector<16x8xf32>
    %262 = vector.shape_cast %261 : vector<16x8xf32> to vector<2x8x8xf32>
    "tpu.trace_start"() <{level = 10 : i32, message = "bqd,bkd->bqk"}> : () -> ()
    %cst_77 = arith.constant dense<0.000000e+00> : vector<2x8x8xf32>
    %263 = tpu.matmul %258, %260, %cst_77 {dimension_numbers = #tpu.dot_dimension_numbers<[2], [2], [1], [1], [0, 0, 0, 1, 1, 1], [0], [0]>} : vector<2x8x8xf32>, vector<2x8x8xf32>, vector<2x8x8xf32> -> vector<2x8x8xf32>
    "tpu.trace_stop"() : () -> ()
    %264 = vector.broadcast %29 : vector<2x1x8xf32> to vector<2x8x8xf32>
    %265 = arith.addf %263, %264 : vector<2x8x8xf32>
    %cst_78 = arith.constant dense<0xFF800000> : vector<2x8xf32>
    %266 = vector.multi_reduction <maximumf>, %265, %cst_78 [2] : vector<2x8x8xf32> to vector<2x8xf32>
    %267 = vector.shape_cast %266 : vector<2x8xf32> to vector<2x8x1xf32>
    %268 = vector.broadcast %267 : vector<2x8x1xf32> to vector<2x8x8xf32>
    %269 = arith.subf %265, %268 : vector<2x8x8xf32>
    %270 = math.exp %269 : vector<2x8x8xf32>
    %cst_79 = arith.constant dense<0.000000e+00> : vector<2x8xf32>
    %271 = vector.multi_reduction <add>, %270, %cst_79 [2] : vector<2x8x8xf32> to vector<2x8xf32>
    %272 = vector.shape_cast %271 : vector<2x8xf32> to vector<2x8x1xf32>
    %273 = tpu.reciprocal %272 {approx = true} : vector<2x8x1xf32> -> vector<2x8x1xf32>
    %274 = vector.broadcast %273 : vector<2x8x1xf32> to vector<2x8x8xf32>
    %275 = arith.mulf %270, %274 : vector<2x8x8xf32>
    "tpu.trace_start"() <{level = 10 : i32, message = "bqk,bkd->bqd"}> : () -> ()
    %cst_80 = arith.constant dense<0.000000e+00> : vector<2x8x8xf32>
    %276 = tpu.matmul %275, %262, %cst_80 {dimension_numbers = #tpu.dot_dimension_numbers<[2], [1], [1], [2], [0, 0, 0, 1, 1, 2], [0], [0]>} : vector<2x8x8xf32>, vector<2x8x8xf32>, vector<2x8x8xf32> -> vector<2x8x8xf32>
    "tpu.trace_stop"() : () -> ()
    %277 = vector.shape_cast %276 : vector<2x8x8xf32> to vector<16x8xf32>
    %278 = vector.extract_strided_slice %226 {offsets = [8, 0], sizes = [8, 32], strides = [1, 1]} : vector<32x32xf32> to vector<8x32xf32>
    %cst_81 = arith.constant dense<0.000000e+00> : vector<16x32xf32>
    %279 = tpu.matmul %277, %278, %cst_81 {dimension_numbers = #tpu.dot_dimension_numbers<[1], [0], [0], [1], [0, 0, 1, 1], [], []>} : vector<16x8xf32>, vector<8x32xf32>, vector<16x32xf32> -> vector<16x32xf32>
    %280 = arith.addf %256, %279 : vector<16x32xf32>
    %281 = vector.extract_strided_slice %231 {offsets = [0, 16], sizes = [16, 8], strides = [1, 1]} : vector<16x96xf32> to vector<16x8xf32>
    %282 = vector.shape_cast %281 : vector<16x8xf32> to vector<2x8x8xf32>
    %283 = vector.extract_strided_slice %231 {offsets = [0, 48], sizes = [16, 8], strides = [1, 1]} : vector<16x96xf32> to vector<16x8xf32>
    %284 = vector.shape_cast %283 : vector<16x8xf32> to vector<2x8x8xf32>
    %285 = vector.extract_strided_slice %231 {offsets = [0, 80], sizes = [16, 8], strides = [1, 1]} : vector<16x96xf32> to vector<16x8xf32>
    %286 = vector.shape_cast %285 : vector<16x8xf32> to vector<2x8x8xf32>
    "tpu.trace_start"() <{level = 10 : i32, message = "bqd,bkd->bqk"}> : () -> ()
    %cst_82 = arith.constant dense<0.000000e+00> : vector<2x8x8xf32>
    %287 = tpu.matmul %282, %284, %cst_82 {dimension_numbers = #tpu.dot_dimension_numbers<[2], [2], [1], [1], [0, 0, 0, 1, 1, 1], [0], [0]>} : vector<2x8x8xf32>, vector<2x8x8xf32>, vector<2x8x8xf32> -> vector<2x8x8xf32>
    "tpu.trace_stop"() : () -> ()
    %288 = vector.broadcast %29 : vector<2x1x8xf32> to vector<2x8x8xf32>
    %289 = arith.addf %287, %288 : vector<2x8x8xf32>
    %cst_83 = arith.constant dense<0xFF800000> : vector<2x8xf32>
    %290 = vector.multi_reduction <maximumf>, %289, %cst_83 [2] : vector<2x8x8xf32> to vector<2x8xf32>
    %291 = vector.shape_cast %290 : vector<2x8xf32> to vector<2x8x1xf32>
    %292 = vector.broadcast %291 : vector<2x8x1xf32> to vector<2x8x8xf32>
    %293 = arith.subf %289, %292 : vector<2x8x8xf32>
    %294 = math.exp %293 : vector<2x8x8xf32>
    %cst_84 = arith.constant dense<0.000000e+00> : vector<2x8xf32>
    %295 = vector.multi_reduction <add>, %294, %cst_84 [2] : vector<2x8x8xf32> to vector<2x8xf32>
    %296 = vector.shape_cast %295 : vector<2x8xf32> to vector<2x8x1xf32>
    %297 = tpu.reciprocal %296 {approx = true} : vector<2x8x1xf32> -> vector<2x8x1xf32>
    %298 = vector.broadcast %297 : vector<2x8x1xf32> to vector<2x8x8xf32>
    %299 = arith.mulf %294, %298 : vector<2x8x8xf32>
    "tpu.trace_start"() <{level = 10 : i32, message = "bqk,bkd->bqd"}> : () -> ()
    %cst_85 = arith.constant dense<0.000000e+00> : vector<2x8x8xf32>
    %300 = tpu.matmul %299, %286, %cst_85 {dimension_numbers = #tpu.dot_dimension_numbers<[2], [1], [1], [2], [0, 0, 0, 1, 1, 2], [0], [0]>} : vector<2x8x8xf32>, vector<2x8x8xf32>, vector<2x8x8xf32> -> vector<2x8x8xf32>
    "tpu.trace_stop"() : () -> ()
    %301 = vector.shape_cast %300 : vector<2x8x8xf32> to vector<16x8xf32>
    %302 = vector.extract_strided_slice %226 {offsets = [16, 0], sizes = [8, 32], strides = [1, 1]} : vector<32x32xf32> to vector<8x32xf32>
    %cst_86 = arith.constant dense<0.000000e+00> : vector<16x32xf32>
    %303 = tpu.matmul %301, %302, %cst_86 {dimension_numbers = #tpu.dot_dimension_numbers<[1], [0], [0], [1], [0, 0, 1, 1], [], []>} : vector<16x8xf32>, vector<8x32xf32>, vector<16x32xf32> -> vector<16x32xf32>
    %304 = arith.addf %280, %303 : vector<16x32xf32>
    %305 = vector.extract_strided_slice %231 {offsets = [0, 24], sizes = [16, 8], strides = [1, 1]} : vector<16x96xf32> to vector<16x8xf32>
    %306 = vector.shape_cast %305 : vector<16x8xf32> to vector<2x8x8xf32>
    %307 = vector.extract_strided_slice %231 {offsets = [0, 56], sizes = [16, 8], strides = [1, 1]} : vector<16x96xf32> to vector<16x8xf32>
    %308 = vector.shape_cast %307 : vector<16x8xf32> to vector<2x8x8xf32>
    %309 = vector.extract_strided_slice %231 {offsets = [0, 88], sizes = [16, 8], strides = [1, 1]} : vector<16x96xf32> to vector<16x8xf32>
    %310 = vector.shape_cast %309 : vector<16x8xf32> to vector<2x8x8xf32>
    "tpu.trace_start"() <{level = 10 : i32, message = "bqd,bkd->bqk"}> : () -> ()
    %cst_87 = arith.constant dense<0.000000e+00> : vector<2x8x8xf32>
    %311 = tpu.matmul %306, %308, %cst_87 {dimension_numbers = #tpu.dot_dimension_numbers<[2], [2], [1], [1], [0, 0, 0, 1, 1, 1], [0], [0]>} : vector<2x8x8xf32>, vector<2x8x8xf32>, vector<2x8x8xf32> -> vector<2x8x8xf32>
    "tpu.trace_stop"() : () -> ()
    %312 = vector.broadcast %29 : vector<2x1x8xf32> to vector<2x8x8xf32>
    %313 = arith.addf %311, %312 : vector<2x8x8xf32>
    %cst_88 = arith.constant dense<0xFF800000> : vector<2x8xf32>
    %314 = vector.multi_reduction <maximumf>, %313, %cst_88 [2] : vector<2x8x8xf32> to vector<2x8xf32>
    %315 = vector.shape_cast %314 : vector<2x8xf32> to vector<2x8x1xf32>
    %316 = vector.broadcast %315 : vector<2x8x1xf32> to vector<2x8x8xf32>
    %317 = arith.subf %313, %316 : vector<2x8x8xf32>
    %318 = math.exp %317 : vector<2x8x8xf32>
    %cst_89 = arith.constant dense<0.000000e+00> : vector<2x8xf32>
    %319 = vector.multi_reduction <add>, %318, %cst_89 [2] : vector<2x8x8xf32> to vector<2x8xf32>
    %320 = vector.shape_cast %319 : vector<2x8xf32> to vector<2x8x1xf32>
    %321 = tpu.reciprocal %320 {approx = true} : vector<2x8x1xf32> -> vector<2x8x1xf32>
    %322 = vector.broadcast %321 : vector<2x8x1xf32> to vector<2x8x8xf32>
    %323 = arith.mulf %318, %322 : vector<2x8x8xf32>
    "tpu.trace_start"() <{level = 10 : i32, message = "bqk,bkd->bqd"}> : () -> ()
    %cst_90 = arith.constant dense<0.000000e+00> : vector<2x8x8xf32>
    %324 = tpu.matmul %323, %310, %cst_90 {dimension_numbers = #tpu.dot_dimension_numbers<[2], [1], [1], [2], [0, 0, 0, 1, 1, 2], [0], [0]>} : vector<2x8x8xf32>, vector<2x8x8xf32>, vector<2x8x8xf32> -> vector<2x8x8xf32>
    "tpu.trace_stop"() : () -> ()
    %325 = vector.shape_cast %324 : vector<2x8x8xf32> to vector<16x8xf32>
    %326 = vector.extract_strided_slice %226 {offsets = [24, 0], sizes = [8, 32], strides = [1, 1]} : vector<32x32xf32> to vector<8x32xf32>
    %cst_91 = arith.constant dense<0.000000e+00> : vector<16x32xf32>
    %327 = tpu.matmul %325, %326, %cst_91 {dimension_numbers = #tpu.dot_dimension_numbers<[1], [0], [0], [1], [0, 0, 1, 1], [], []>} : vector<16x8xf32>, vector<8x32xf32>, vector<16x32xf32> -> vector<16x32xf32>
    %328 = arith.addf %304, %327 : vector<16x32xf32>
    %329 = arith.addf %214, %328 : vector<16x32xf32>
    %330 = vector.broadcast %218 : vector<1x32xf32> to vector<16x32xf32>
    %331 = arith.addf %329, %330 : vector<16x32xf32>
    %cst_92 = arith.constant dense<0.000000e+00> : vector<16xf32>
    %332 = vector.multi_reduction <add>, %331, %cst_92 [1] : vector<16x32xf32> to vector<16xf32>
    %333 = vector.shape_cast %332 : vector<16xf32> to vector<16x1xf32>
    %cst_93 = arith.constant 3.200000e+01 : f32
    %334 = vector.broadcast %cst_93 : f32 to vector<16x1xf32>
    %335 = arith.divf %333, %334 : vector<16x1xf32>
    %336 = vector.broadcast %335 : vector<16x1xf32> to vector<16x32xf32>
    %337 = arith.subf %331, %336 : vector<16x32xf32>
    %338 = arith.mulf %337, %337 : vector<16x32xf32>
    %cst_94 = arith.constant dense<0.000000e+00> : vector<16xf32>
    %339 = vector.multi_reduction <add>, %338, %cst_94 [1] : vector<16x32xf32> to vector<16xf32>
    %340 = vector.shape_cast %339 : vector<16xf32> to vector<16x1xf32>
    %cst_95 = arith.constant 3.200000e+01 : f32
    %341 = vector.broadcast %cst_95 : f32 to vector<16x1xf32>
    %342 = arith.divf %340, %341 : vector<16x1xf32>
    %343 = vector.broadcast %335 : vector<16x1xf32> to vector<16x32xf32>
    %344 = arith.subf %331, %343 : vector<16x32xf32>
    %cst_96 = arith.constant 9.99999974E-6 : f32
    %345 = vector.broadcast %cst_96 : f32 to vector<16x1xf32>
    %346 = arith.addf %342, %345 : vector<16x1xf32>
    %347 = math.rsqrt %346 : vector<16x1xf32>
    %348 = vector.broadcast %347 : vector<16x1xf32> to vector<16x32xf32>
    %349 = arith.mulf %344, %348 : vector<16x32xf32>
    %350 = vector.broadcast %219 : vector<1x32xf32> to vector<16x32xf32>
    %351 = arith.mulf %349, %350 : vector<16x32xf32>
    %352 = vector.broadcast %220 : vector<1x32xf32> to vector<16x32xf32>
    %353 = arith.addf %351, %352 : vector<16x32xf32>
    %c1_97 = arith.constant 1 : index
    %c0_98 = arith.constant 0 : index
    %c0_99 = arith.constant 0 : index
    %354 = vector.load %arg5[%c1_97, %c0_98, %c0_99] : memref<2x32x64xf32, #tpu.memory_space<vmem>>, vector<1x32x64xf32>
    %355 = vector.shape_cast %354 : vector<1x32x64xf32> to vector<32x64xf32>
    %cst_100 = arith.constant dense<0.000000e+00> : vector<16x64xf32>
    %356 = tpu.matmul %353, %355, %cst_100 {dimension_numbers = #tpu.dot_dimension_numbers<[1], [0], [0], [1], [0, 0, 1, 1], [], []>} : vector<16x32xf32>, vector<32x64xf32>, vector<16x64xf32> -> vector<16x64xf32>
    %357 = vector.broadcast %221 : vector<1x64xf32> to vector<16x64xf32>
    %358 = arith.addf %356, %357 : vector<16x64xf32>
    %cst_101 = arith.constant 5.000000e-01 : f32
    %359 = vector.broadcast %cst_101 : f32 to vector<16x64xf32>
    %360 = arith.mulf %359, %358 : vector<16x64xf32>
    %cst_102 = arith.constant 4.471500e-02 : f32
    %361 = vector.broadcast %cst_102 : f32 to vector<16x64xf32>
    %362 = arith.mulf %361, %358 : vector<16x64xf32>
    %363 = arith.mulf %362, %358 : vector<16x64xf32>
    %364 = arith.mulf %363, %358 : vector<16x64xf32>
    %365 = arith.addf %358, %364 : vector<16x64xf32>
    %cst_103 = arith.constant 0.797884583 : f32
    %366 = vector.broadcast %cst_103 : f32 to vector<16x64xf32>
    %367 = arith.mulf %366, %365 : vector<16x64xf32>
    %368 = math.tanh %367 : vector<16x64xf32>
    %cst_104 = arith.constant 1.000000e+00 : f32
    %369 = vector.broadcast %cst_104 : f32 to vector<16x64xf32>
    %370 = arith.addf %369, %368 : vector<16x64xf32>
    %371 = arith.mulf %360, %370 : vector<16x64xf32>
    %c1_105 = arith.constant 1 : index
    %c0_106 = arith.constant 0 : index
    %c0_107 = arith.constant 0 : index
    %372 = vector.load %arg6[%c1_105, %c0_106, %c0_107] : memref<2x64x32xf32, #tpu.memory_space<vmem>>, vector<1x64x32xf32>
    %373 = vector.shape_cast %372 : vector<1x64x32xf32> to vector<64x32xf32>
    %cst_108 = arith.constant dense<0.000000e+00> : vector<16x32xf32>
    %374 = tpu.matmul %371, %373, %cst_108 {dimension_numbers = #tpu.dot_dimension_numbers<[1], [0], [0], [1], [0, 0, 1, 1], [], []>} : vector<16x64xf32>, vector<64x32xf32>, vector<16x32xf32> -> vector<16x32xf32>
    %375 = vector.broadcast %222 : vector<1x32xf32> to vector<16x32xf32>
    %376 = arith.addf %374, %375 : vector<16x32xf32>
    %377 = arith.addf %353, %376 : vector<16x32xf32>
    %cst_109 = arith.constant dense<0.000000e+00> : vector<16xf32>
    %378 = vector.multi_reduction <add>, %377, %cst_109 [1] : vector<16x32xf32> to vector<16xf32>
    %379 = vector.shape_cast %378 : vector<16xf32> to vector<16x1xf32>
    %cst_110 = arith.constant 3.200000e+01 : f32
    %380 = vector.broadcast %cst_110 : f32 to vector<16x1xf32>
    %381 = arith.divf %379, %380 : vector<16x1xf32>
    %382 = vector.broadcast %381 : vector<16x1xf32> to vector<16x32xf32>
    %383 = arith.subf %377, %382 : vector<16x32xf32>
    %384 = arith.mulf %383, %383 : vector<16x32xf32>
    %cst_111 = arith.constant dense<0.000000e+00> : vector<16xf32>
    %385 = vector.multi_reduction <add>, %384, %cst_111 [1] : vector<16x32xf32> to vector<16xf32>
    %386 = vector.shape_cast %385 : vector<16xf32> to vector<16x1xf32>
    %cst_112 = arith.constant 3.200000e+01 : f32
    %387 = vector.broadcast %cst_112 : f32 to vector<16x1xf32>
    %388 = arith.divf %386, %387 : vector<16x1xf32>
    %389 = vector.broadcast %381 : vector<16x1xf32> to vector<16x32xf32>
    %390 = arith.subf %377, %389 : vector<16x32xf32>
    %cst_113 = arith.constant 9.99999974E-6 : f32
    %391 = vector.broadcast %cst_113 : f32 to vector<16x1xf32>
    %392 = arith.addf %388, %391 : vector<16x1xf32>
    %393 = math.rsqrt %392 : vector<16x1xf32>
    %394 = vector.broadcast %393 : vector<16x1xf32> to vector<16x32xf32>
    %395 = arith.mulf %390, %394 : vector<16x32xf32>
    %396 = vector.broadcast %223 : vector<1x32xf32> to vector<16x32xf32>
    %397 = arith.mulf %395, %396 : vector<16x32xf32>
    %398 = vector.broadcast %224 : vector<1x32xf32> to vector<16x32xf32>
    %399 = arith.addf %397, %398 : vector<16x32xf32>
    %400 = vector.shape_cast %399 : vector<16x32xf32> to vector<2x8x32xf32>
    %401 = vector.extract_strided_slice %400 {offsets = [0, 0, 0], sizes = [2, 1, 32], strides = [1, 1, 1]} : vector<2x8x32xf32> to vector<2x1x32xf32>
    %402 = vector.shape_cast %401 : vector<2x1x32xf32> to vector<2x32xf32>
    %c0_114 = arith.constant 0 : index
    %c0_115 = arith.constant 0 : index
    %403 = vector.load %arg8[%c0_114, %c0_115] : memref<32x32xf32, #tpu.memory_space<vmem>>, vector<32x32xf32>
    %cst_116 = arith.constant dense<0.000000e+00> : vector<2x32xf32>
    %404 = tpu.matmul %402, %403, %cst_116 {dimension_numbers = #tpu.dot_dimension_numbers<[1], [0], [0], [1], [0, 0, 1, 1], [], []>} : vector<2x32xf32>, vector<32x32xf32>, vector<2x32xf32> -> vector<2x32xf32>
    %405 = vector.broadcast %3 : vector<1x32xf32> to vector<2x32xf32>
    %406 = arith.addf %404, %405 : vector<2x32xf32>
    %407 = math.tanh %406 : vector<2x32xf32>
    %c0_117 = arith.constant 0 : index
    %c0_118 = arith.constant 0 : index
    %408 = vector.load %arg9[%c0_117, %c0_118] : memref<32x128xf32, #tpu.memory_space<vmem>>, vector<32x128xf32>
    %cst_119 = arith.constant dense<0.000000e+00> : vector<2x128xf32>
    %409 = tpu.matmul %407, %408, %cst_119 {dimension_numbers = #tpu.dot_dimension_numbers<[1], [0], [0], [1], [0, 0, 1, 1], [], []>} : vector<2x32xf32>, vector<32x128xf32>, vector<2x128xf32> -> vector<2x128xf32>
    %410 = vector.broadcast %4 : vector<1x128xf32> to vector<2x128xf32>
    %411 = arith.addf %409, %410 : vector<2x128xf32>
    %c0_120 = arith.constant 0 : index
    %c0_121 = arith.constant 0 : index
    %412 = vector.load %arg10[%c0_120, %c0_121] : memref<2x128xf32, #tpu.memory_space<vmem>>, vector<2x128xf32>
    tpu.vector_store %arg10[%c0_120, %c0_121], %411 {strides = array<i32>} : memref<2x128xf32, #tpu.memory_space<vmem>>, vector<2x128xf32>,
    return
  }
}

</mosaic_0001>

<llo_original>
// kernel: relation_extraction_forward.1
$region0: #{relation_extraction_forward.1}
  #allocation0 [shape = 'u32[]', space=smem, size = 0x4, offset = 0x4, fixed_abs, tag = 'smem constant byte address 0x4 - core index']
  #allocation1 [shape = 'u32[72,128]{1,0:T(1,128)}', space=vmem, size = 0x9000, scoped, tag = 'internal scratch']
  %s0 = inlined_call_operand.vmem [shape: f32[16,32], index: 0, kind: input, shape index: {}]
  %s1 = inlined_call_operand.vmem [shape: f32[2,8], index: 1, kind: input, shape index: {}]
  %s2 = inlined_call_operand.vmem [shape: f32[4,128], index: 2, kind: input, shape index: {}]
  %s3 = inlined_call_operand.vmem [shape: f32[2,32,96], index: 3, kind: input, shape index: {}]
  %s4 = inlined_call_operand.vmem [shape: f32[2,32,32], index: 4, kind: input, shape index: {}]
  %s5 = inlined_call_operand.vmem [shape: f32[2,32,64], index: 5, kind: input, shape index: {}]
  %s6 = inlined_call_operand.vmem [shape: f32[2,64,32], index: 6, kind: input, shape index: {}]
  %s7 = inlined_call_operand.vmem [shape: f32[2,8,128], index: 7, kind: input, shape index: {}]
  %s8 = inlined_call_operand.vmem [shape: f32[32,32], index: 8, kind: input, shape index: {}]
  %s9 = inlined_call_operand.vmem [shape: f32[32,128], index: 9, kind: input, shape index: {}]
  %s10 = inlined_call_operand.hbm [shape: f32[2,128], index: 10, kind: output, shape index: {}]
  %s11 = sld [smem:[#allocation0]]
  $region50: #{relation_extraction_forward.1} parent=0
    _
  %s13 = ssub.s32 1, %s11
  %s14 = scalar_select 0, %s13, %s11
  $region1: #{relation_extraction_forward.1} parent=0
    #allocation2 [shape = 'u8[1024]{0}', space=vmem, size = 0x400, scoped, tag = 'output window, operand 0, single buffered']
    #allocation3 [shape = 's32[1]{0}', space=sflag, size = 0x4, scoped, tag = 'scoped memory for relation_extraction_forward.1']
    %15 = vsyncpa [#allocation3], 0
    // Predicated region
    $region2: #{relation_extraction_forward.1} parent=1 // pred_check
      _
    $region3: #{relation_extraction_forward.1} parent=1 // pred_check_branch
      %17 = sbr.rel (0) target = $region5
    $region4: #{relation_extraction_forward.1} parent=1 // pred_region
      _
    $region5: #{relation_extraction_forward.1} parent=1 // pred_fallthru
      _
    // Predicated region
    $region6: #{relation_extraction_forward.1} parent=1 // pred_check
      _
    $region7: #{relation_extraction_forward.1} parent=1 // pred_check_branch
      %19 = sbr.rel (0) target = $region9
    $region8: #{relation_extraction_forward.1} parent=1 // pred_region
      _
    $region9: #{relation_extraction_forward.1} parent=1 // pred_fallthru
      _
    // Predicated region
    $region10: #{relation_extraction_forward.1} parent=1 // pred_check
      _
    $region11: #{relation_extraction_forward.1} parent=1 // pred_check_branch
      %21 = sbr.rel (0) target = $region13
    $region12: #{relation_extraction_forward.1} parent=1 // pred_region
      _
    $region13: #{relation_extraction_forward.1} parent=1 // pred_fallthru
      _
    // Predicated region
    $region14: #{relation_extraction_forward.1} parent=1 // pred_check
      _
    $region15: #{relation_extraction_forward.1} parent=1 // pred_check_branch
      %23 = sbr.rel (0) target = $region17
    $region16: #{relation_extraction_forward.1} parent=1 // pred_region
      _
    $region17: #{relation_extraction_forward.1} parent=1 // pred_fallthru
      _
    // Predicated region
    $region18: #{relation_extraction_forward.1} parent=1 // pred_check
      _
    $region19: #{relation_extraction_forward.1} parent=1 // pred_check_branch
      %25 = sbr.rel (0) target = $region21
    $region20: #{relation_extraction_forward.1} parent=1 // pred_region
      _
    $region21: #{relation_extraction_forward.1} parent=1 // pred_fallthru
      _
    // Predicated region
    $region22: #{relation_extraction_forward.1} parent=1 // pred_check
      _
    $region23: #{relation_extraction_forward.1} parent=1 // pred_check_branch
      %27 = sbr.rel (0) target = $region25
    $region24: #{relation_extraction_forward.1} parent=1 // pred_region
      _
    $region25: #{relation_extraction_forward.1} parent=1 // pred_fallthru
      _
    // Predicated region
    $region26: #{relation_extraction_forward.1} parent=1 // pred_check
      _
    $region27: #{relation_extraction_forward.1} parent=1 // pred_check_branch
      %29 = sbr.rel (0) target = $region29
    $region28: #{relation_extraction_forward.1} parent=1 // pred_region
      _
    $region29: #{relation_extraction_forward.1} parent=1 // pred_fallthru
      _
    // Predicated region
    $region30: #{relation_extraction_forward.1} parent=1 // pred_check
      _
    $region31: #{relation_extraction_forward.1} parent=1 // pred_check_branch
      %31 = sbr.rel (0) target = $region33
    $region32: #{relation_extraction_forward.1} parent=1 // pred_region
      _
    $region33: #{relation_extraction_forward.1} parent=1 // pred_fallthru
      _
    // Predicated region
    $region34: #{relation_extraction_forward.1} parent=1 // pred_check
      _
    $region35: #{relation_extraction_forward.1} parent=1 // pred_check_branch
      %33 = sbr.rel (0) target = $region37
    $region36: #{relation_extraction_forward.1} parent=1 // pred_region
      _
    $region37: #{relation_extraction_forward.1} parent=1 // pred_fallthru
      _
    // Predicated region
    $region38: #{relation_extraction_forward.1} parent=1 // pred_check
      _
    $region39: #{relation_extraction_forward.1} parent=1 // pred_check_branch
      %35 = sbr.rel (0) target = $region41
    $region40: #{relation_extraction_forward.1} parent=1 // pred_region
      _
    $region41: #{relation_extraction_forward.1} parent=1 // pred_fallthru
      _
    %v36 = vld [vmem:[%s2] sm:$0xf]
    %v37 = vld [vmem:[%s0] sm:$0xff]
    %v38 = vld [vmem:[%s0 + $0x8] sm:$0xff]
    %vm39 = vcmask 261120
    %v40 = vsel %vm39, %v37, 0.0
    %41 = vadd.xlane.f32.xlu0 %v40
    %v42 = vpop.xlane.xlu0 %41
    %v43 = vsel %vm39, %v38, 0.0
    %44 = vadd.xlane.f32.xlu0 %v43
    %v45 = vpop.xlane.xlu0 %44
    %v46 = vrcp.pop 32.0
    %v47 = vmul.f32 32.0, %v46
    %v48 = vsub.f32 1.0, %v47
    %v49 = vmul.f32 %v46, %v48
    %v50 = vadd.f32 %v46, %v49
    %vm51 = vweird.f32 %v46
    %v52 = vsel %vm51, %v46, %v50
    %v53 = vmul.f32 %v42, %v52
    %v54 = vmul.f32 %v45, %v52
    %v55 = vsub.f32 %v37, %v53
    %v56 = vsub.f32 %v38, %v54
    %v57 = vmul.f32 %v55, %v55
    %v58 = vmul.f32 %v56, %v56
    %v59 = vsel %vm39, %v57, 0.0
    %60 = vadd.xlane.f32.xlu0 %v59
    %v61 = vpop.xlane.xlu0 %60
    %v62 = vsel %vm39, %v58, 0.0
    %63 = vadd.xlane.f32.xlu0 %v62
    %v64 = vpop.xlane.xlu0 %63
    %v65 = vmul.f32 %v61, %v52
    %v66 = vmul.f32 %v64, %v52
    %v67 = vadd.f32 %v65, 1e-05
    %v68 = vadd.f32 %v66, 1e-05
    %v69 = vrsqrt.pop %v67
    %v70 = vmul.f32 %v69, %v67
    %v71 = vmul.f32 %v70, %v69
    %v72 = vmul.f32 0.5, %v71
    %v73 = vsub.f32 1.5, %v72
    %v74 = vmul.f32 %v69, %v73
    %vm75 = vweird.f32 %v67
    %vm76 = vweird.f32 %v69
    %vm77 = vmor %vm75, %vm76
    %v78 = vsel %vm77, %v69, %v74
    %v79 = vrsqrt.pop %v68
    %v80 = vmul.f32 %v79, %v68
    %v81 = vmul.f32 %v80, %v79
    %v82 = vmul.f32 0.5, %v81
    %v83 = vsub.f32 1.5, %v82
    %v84 = vmul.f32 %v79, %v83
    %vm85 = vweird.f32 %v68
    %vm86 = vweird.f32 %v79
    %vm87 = vmor %vm85, %vm86
    %v88 = vsel %vm87, %v79, %v84
    %v89 = vmul.f32 %v55, %v78
    %v90 = vmul.f32 %v56, %v88
    %v91 = vperm.slane %v36, 0
    %v92 = vmul.f32 %v89, %v91
    %v93 = vmul.f32 %v90, %v91
    %v94 = vperm.slane %v36, 1
    %v95 = vadd.f32 %v92, %v94
    %v96 = vadd.f32 %v93, %v94
    %v97 = vld [vmem:[%s1] sm:$0x3]
    %v99 = vrot.slane %v97, 1
    %v100 = vld [vmem:[%s7] sm:$0xff]
    %v101 = vld [vmem:[%s4] sm:$0xff]
    %v102 = vld [vmem:[%s4 + $0x8] sm:$0xff]
    %v103 = vld [vmem:[%s4 + $0x10] sm:$0xff]
    %v104 = vld [vmem:[%s4 + $0x18] sm:$0xff]
    %v105 = vld [vmem:[%s3] sm:$0xff]
    %v106 = vld [vmem:[%s3 + $0x8] sm:$0xff]
    %v107 = vld [vmem:[%s3 + $0x10] sm:$0xff]
    %v108 = vld [vmem:[%s3 + $0x18] sm:$0xff]
    %v109 = vperm.slane %v100, 0
    %v111 = vsel %vm39, %v95, 0
    %v114 = vsel %vm39, %v96, 0
    %116 = vmatpush.msra.mxu0 0.0
    %117 = vmatpush.msra.mxu0 0.0
    %118 = vmatpush.msra.mxu0 0.0
    %119 = vmatpush.msra.mxu0 0.0
    %120 = vmatpush.msra.mxu0 0.0
    %121 = vmatpush.msra.mxu0 0.0
    %122 = vmatpush.msra.mxu0 0.0
    %123 = vmatpush.msra.mxu0 0.0
    %124 = vmatpush.msra.mxu0 0.0
    %125 = vmatpush.msra.mxu0 0.0
    %126 = vmatpush.msra.mxu0 0.0
    %127 = vmatpush.msra.mxu0 0.0
    %128 = vmatpush.msra.mxu0 %v108
    %129 = vmatpush.msra.mxu0 %v107
    %130 = vmatpush.msra.mxu0 %v106
    %131 = vmatpush.msra.mxu0 %v105
    %132 = vmatmul.f32.gmra.mxu0 %v111
    %v133 = vpop.f32.mrf.mxu0
    %v134 = vadd.f32 %v109, %v133
    %135 = vmatmul.f32.gmra.mxu0 %v114
    %v136 = vpop.f32.mrf.mxu0
    %v137 = vadd.f32 %v109, %v136
    %138 = vdwg.mxu0
    %v139 = vperm.slane %v97, 0
    %v140 = vperm.slane %v99, 0
    %144 = vrot.lane.b32.xlu0 %v134, 96
    %v145 = vpop.permute.xlu0 %144
    %vm146 = vcmask 64512
    %v147 = vsel %vm146, %v134, 0
    %v149 = vsel %vm146, %v145, 0
    %151 = vmatpush.xpose.msra.mxu0 0.0
    %152 = vmatpush.xpose.msra.mxu0 0.0
    %153 = vmatpush.xpose.msra.mxu0 0.0
    %154 = vmatpush.xpose.msra.mxu0 0.0
    %155 = vmatpush.xpose.msra.mxu0 0.0
    %156 = vmatpush.xpose.msra.mxu0 0.0
    %157 = vmatpush.xpose.msra.mxu0 0.0
    %158 = vmatpush.xpose.msra.mxu0 0.0
    %159 = vmatpush.xpose.msra.mxu0 0.0
    %160 = vmatpush.xpose.msra.mxu0 0.0
    %161 = vmatpush.xpose.msra.mxu0 0.0
    %162 = vmatpush.xpose.msra.mxu0 0.0
    %163 = vmatpush.xpose.msra.mxu0 0.0
    %164 = vmatpush.xpose.msra.mxu0 0.0
    %165 = vmatpush.xpose.msra.mxu0 0.0
    %166 = vmatpush.xpose.msra.mxu0 %v149
    %167 = vmatmul.f32.gmra.mxu0 %v147
    %v168 = vpop.f32.mrf.mxu0
    %v169 = vadd.f32 %v139, %v168
    %170 = vdwg.mxu0
    %172 = vrot.lane.b32.xlu0 %v137, 96
    %v173 = vpop.permute.xlu0 %172
    %v174 = vsel %vm146, %v137, 0
    %v176 = vsel %vm146, %v173, 0
    %178 = vmatpush.xpose.msra.mxu0 0.0
    %179 = vmatpush.xpose.msra.mxu0 0.0
    %180 = vmatpush.xpose.msra.mxu0 0.0
    %181 = vmatpush.xpose.msra.mxu0 0.0
    %182 = vmatpush.xpose.msra.mxu0 0.0
    %183 = vmatpush.xpose.msra.mxu0 0.0
    %184 = vmatpush.xpose.msra.mxu0 0.0
    %185 = vmatpush.xpose.msra.mxu0 0.0
    %186 = vmatpush.xpose.msra.mxu0 0.0
    %187 = vmatpush.xpose.msra.mxu0 0.0
    %188 = vmatpush.xpose.msra.mxu0 0.0
    %189 = vmatpush.xpose.msra.mxu0 0.0
    %190 = vmatpush.xpose.msra.mxu0 0.0
    %191 = vmatpush.xpose.msra.mxu0 0.0
    %192 = vmatpush.xpose.msra.mxu0 0.0
    %193 = vmatpush.xpose.msra.mxu0 %v176
    %194 = vmatmul.f32.gmra.mxu0 %v174
    %v195 = vpop.f32.mrf.mxu0
    %v196 = vadd.f32 %v140, %v195
    %197 = vdwg.mxu0
    %v198 = vsel %vm146, %v169, -inf
    %199 = vmax.xlane.f32.xlu0 %v198
    %v200 = vpop.xlane.xlu0 %199
    %v201 = vsel %vm146, %v196, -inf
    %202 = vmax.xlane.f32.xlu0 %v201
    %v203 = vpop.xlane.xlu0 %202
    %v204 = vsub.f32 %v169, %v200
    %v205 = vsub.f32 %v196, %v203
    %v206 = vmul.f32 %v204, 1.442695
    %v207 = vpow.pop %v206
    %v208 = vmul.f32 %v205, 1.442695
    %v209 = vpow.pop %v208
    %v210 = vsel %vm146, %v207, 0.0
    %211 = vadd.xlane.f32.xlu0 %v210
    %v212 = vpop.xlane.xlu0 %211
    %v213 = vsel %vm146, %v209, 0.0
    %214 = vadd.xlane.f32.xlu0 %v213
    %v215 = vpop.xlane.xlu0 %214
    %v216 = vrcp.pop %v212
    %v217 = vrcp.pop %v215
    %v218 = vmul.f32 %v207, %v216
    %v219 = vmul.f32 %v209, %v217
    %220 = vrot.lane.b32.xlu0 %v134, 64
    %v221 = vpop.permute.xlu0 %220
    %v224 = vsel %vm146, %v218, 0
    %226 = vmatpush.msra.mxu0 0.0
    %227 = vmatpush.msra.mxu0 0.0
    %228 = vmatpush.msra.mxu0 0.0
    %229 = vmatpush.msra.mxu0 0.0
    %230 = vmatpush.msra.mxu0 0.0
    %231 = vmatpush.msra.mxu0 0.0
    %232 = vmatpush.msra.mxu0 0.0
    %233 = vmatpush.msra.mxu0 0.0
    %234 = vmatpush.msra.mxu0 0.0
    %235 = vmatpush.msra.mxu0 0.0
    %236 = vmatpush.msra.mxu0 0.0
    %237 = vmatpush.msra.mxu0 0.0
    %238 = vmatpush.msra.mxu0 0.0
    %239 = vmatpush.msra.mxu0 0.0
    %240 = vmatpush.msra.mxu0 0.0
    %241 = vmatpush.msra.mxu0 %v221
    %242 = vmatmul.f32.gmra.mxu0 %v224
    %v243 = vpop.f32.mrf.mxu0
    %v244 = vadd.f32 0.0, %v243
    %245 = vdwg.mxu0
    %246 = vrot.lane.b32.xlu0 %v137, 64
    %v247 = vpop.permute.xlu0 %246
    %v250 = vsel %vm146, %v219, 0
    %252 = vmatpush.msra.mxu0 0.0
    %253 = vmatpush.msra.mxu0 0.0
    %254 = vmatpush.msra.mxu0 0.0
    %255 = vmatpush.msra.mxu0 0.0
    %256 = vmatpush.msra.mxu0 0.0
    %257 = vmatpush.msra.mxu0 0.0
    %258 = vmatpush.msra.mxu0 0.0
    %259 = vmatpush.msra.mxu0 0.0
    %260 = vmatpush.msra.mxu0 0.0
    %261 = vmatpush.msra.mxu0 0.0
    %262 = vmatpush.msra.mxu0 0.0
    %263 = vmatpush.msra.mxu0 0.0
    %264 = vmatpush.msra.mxu0 0.0
    %265 = vmatpush.msra.mxu0 0.0
    %266 = vmatpush.msra.mxu0 0.0
    %267 = vmatpush.msra.mxu0 %v247
    %268 = vmatmul.f32.gmra.mxu0 %v250
    %v269 = vpop.f32.mrf.mxu0
    %v270 = vadd.f32 0.0, %v269
    %271 = vdwg.mxu0
    %272 = vrot.lane.b32.xlu0 %v134, 120
    %v273 = vpop.permute.xlu0 %272
    %274 = vrot.lane.b32.xlu0 %v134, 88
    %v275 = vpop.permute.xlu0 %274
    %v276 = vsel %vm146, %v273, 0
    %v278 = vsel %vm146, %v275, 0
    %280 = vmatpush.xpose.msra.mxu0 0.0
    %281 = vmatpush.xpose.msra.mxu0 0.0
    %282 = vmatpush.xpose.msra.mxu0 0.0
    %283 = vmatpush.xpose.msra.mxu0 0.0
    %284 = vmatpush.xpose.msra.mxu0 0.0
    %285 = vmatpush.xpose.msra.mxu0 0.0
    %286 = vmatpush.xpose.msra.mxu0 0.0
    %287 = vmatpush.xpose.msra.mxu0 0.0
    %288 = vmatpush.xpose.msra.mxu0 0.0
    %289 = vmatpush.xpose.msra.mxu0 0.0
    %290 = vmatpush.xpose.msra.mxu0 0.0
    %291 = vmatpush.xpose.msra.mxu0 0.0
    %292 = vmatpush.xpose.msra.mxu0 0.0
    %293 = vmatpush.xpose.msra.mxu0 0.0
    %294 = vmatpush.xpose.msra.mxu0 0.0
    %295 = vmatpush.xpose.msra.mxu0 %v278
    %296 = vmatmul.f32.gmra.mxu0 %v276
    %v297 = vpop.f32.mrf.mxu0
    %v298 = vadd.f32 %v139, %v297
    %299 = vdwg.mxu0
    %300 = vrot.lane.b32.xlu0 %v137, 120
    %v301 = vpop.permute.xlu0 %300
    %302 = vrot.lane.b32.xlu0 %v137, 88
    %v303 = vpop.permute.xlu0 %302
    %v304 = vsel %vm146, %v301, 0
    %v306 = vsel %vm146, %v303, 0
    %308 = vmatpush.xpose.msra.mxu0 0.0
    %309 = vmatpush.xpose.msra.mxu0 0.0
    %310 = vmatpush.xpose.msra.mxu0 0.0
    %311 = vmatpush.xpose.msra.mxu0 0.0
    %312 = vmatpush.xpose.msra.mxu0 0.0
    %313 = vmatpush.xpose.msra.mxu0 0.0
    %314 = vmatpush.xpose.msra.mxu0 0.0
    %315 = vmatpush.xpose.msra.mxu0 0.0
    %316 = vmatpush.xpose.msra.mxu0 0.0
    %317 = vmatpush.xpose.msra.mxu0 0.0
    %318 = vmatpush.xpose.msra.mxu0 0.0
    %319 = vmatpush.xpose.msra.mxu0 0.0
    %320 = vmatpush.xpose.msra.mxu0 0.0
    %321 = vmatpush.xpose.msra.mxu0 0.0
    %322 = vmatpush.xpose.msra.mxu0 0.0
    %323 = vmatpush.xpose.msra.mxu0 %v306
    %324 = vmatmul.f32.gmra.mxu0 %v304
    %v325 = vpop.f32.mrf.mxu0
    %v326 = vadd.f32 %v140, %v325
    %327 = vdwg.mxu0
    %v328 = vsel %vm146, %v298, -inf
    %329 = vmax.xlane.f32.xlu0 %v328
    %v330 = vpop.xlane.xlu0 %329
    %v331 = vsel %vm146, %v326, -inf
    %332 = vmax.xlane.f32.xlu0 %v331
    %v333 = vpop.xlane.xlu0 %332
    %v334 = vsub.f32 %v298, %v330
    %v335 = vsub.f32 %v326, %v333
    %v336 = vmul.f32 %v334, 1.442695
    %v337 = vpow.pop %v336
    %v338 = vmul.f32 %v335, 1.442695
    %v339 = vpow.pop %v338
    %v340 = vsel %vm146, %v337, 0.0
    %341 = vadd.xlane.f32.xlu0 %v340
    %v342 = vpop.xlane.xlu0 %341
    %v343 = vsel %vm146, %v339, 0.0
    %344 = vadd.xlane.f32.xlu0 %v343
    %v345 = vpop.xlane.xlu0 %344
    %v346 = vrcp.pop %v342
    %v347 = vrcp.pop %v345
    %v348 = vmul.f32 %v337, %v346
    %v349 = vmul.f32 %v339, %v347
    %350 = vrot.lane.b32.xlu0 %v134, 56
    %v351 = vpop.permute.xlu0 %350
    %v354 = vsel %vm146, %v348, 0
    %356 = vmatpush.msra.mxu0 0.0
    %357 = vmatpush.msra.mxu0 0.0
    %358 = vmatpush.msra.mxu0 0.0
    %359 = vmatpush.msra.mxu0 0.0
    %360 = vmatpush.msra.mxu0 0.0
    %361 = vmatpush.msra.mxu0 0.0
    %362 = vmatpush.msra.mxu0 0.0
    %363 = vmatpush.msra.mxu0 0.0
    %364 = vmatpush.msra.mxu0 0.0
    %365 = vmatpush.msra.mxu0 0.0
    %366 = vmatpush.msra.mxu0 0.0
    %367 = vmatpush.msra.mxu0 0.0
    %368 = vmatpush.msra.mxu0 0.0
    %369 = vmatpush.msra.mxu0 0.0
    %370 = vmatpush.msra.mxu0 0.0
    %371 = vmatpush.msra.mxu0 %v351
    %372 = vmatmul.f32.gmra.mxu0 %v354
    %v373 = vpop.f32.mrf.mxu0
    %v374 = vadd.f32 0.0, %v373
    %375 = vdwg.mxu0
    %376 = vrot.lane.b32.xlu0 %v137, 56
    %v377 = vpop.permute.xlu0 %376
    %v380 = vsel %vm146, %v349, 0
    %382 = vmatpush.msra.mxu0 0.0
    %383 = vmatpush.msra.mxu0 0.0
    %384 = vmatpush.msra.mxu0 0.0
    %385 = vmatpush.msra.mxu0 0.0
    %386 = vmatpush.msra.mxu0 0.0
    %387 = vmatpush.msra.mxu0 0.0
    %388 = vmatpush.msra.mxu0 0.0
    %389 = vmatpush.msra.mxu0 0.0
    %390 = vmatpush.msra.mxu0 0.0
    %391 = vmatpush.msra.mxu0 0.0
    %392 = vmatpush.msra.mxu0 0.0
    %393 = vmatpush.msra.mxu0 0.0
    %394 = vmatpush.msra.mxu0 0.0
    %395 = vmatpush.msra.mxu0 0.0
    %396 = vmatpush.msra.mxu0 0.0
    %397 = vmatpush.msra.mxu0 %v377
    %398 = vmatmul.f32.gmra.mxu0 %v380
    %v399 = vpop.f32.mrf.mxu0
    %v400 = vadd.f32 0.0, %v399
    %401 = vdwg.mxu0
    %v403 = vsel %vm146, %v374, 0
    %v406 = vsel %vm146, %v400, 0
    %408 = vmatpush.msra.mxu0 0.0
    %409 = vmatpush.msra.mxu0 0.0
    %410 = vmatpush.msra.mxu0 0.0
    %411 = vmatpush.msra.mxu0 0.0
    %412 = vmatpush.msra.mxu0 0.0
    %413 = vmatpush.msra.mxu0 0.0
    %414 = vmatpush.msra.mxu0 0.0
    %415 = vmatpush.msra.mxu0 0.0
    %416 = vmatpush.msra.mxu0 0.0
    %417 = vmatpush.msra.mxu0 0.0
    %418 = vmatpush.msra.mxu0 0.0
    %419 = vmatpush.msra.mxu0 0.0
    %420 = vmatpush.msra.mxu0 0.0
    %421 = vmatpush.msra.mxu0 0.0
    %422 = vmatpush.msra.mxu0 0.0
    %423 = vmatpush.msra.mxu0 %v102
    %424 = vmatmul.f32.gmra.mxu0 %v403
    %v425 = vpop.f32.mrf.mxu0
    %v426 = vadd.f32 0.0, %v425
    %427 = vmatmul.f32.gmra.mxu0 %v406
    %v428 = vpop.f32.mrf.mxu0
    %v429 = vadd.f32 0.0, %v428
    %430 = vdwg.mxu0
    %v432 = vsel %vm146, %v244, 0
    %v435 = vsel %vm146, %v270, 0
    %437 = vmatpush.msra.mxu0 0.0
    %438 = vmatpush.msra.mxu0 0.0
    %439 = vmatpush.msra.mxu0 0.0
    %440 = vmatpush.msra.mxu0 0.0
    %441 = vmatpush.msra.mxu0 0.0
    %442 = vmatpush.msra.mxu0 0.0
    %443 = vmatpush.msra.mxu0 0.0
    %444 = vmatpush.msra.mxu0 0.0
    %445 = vmatpush.msra.mxu0 0.0
    %446 = vmatpush.msra.mxu0 0.0
    %447 = vmatpush.msra.mxu0 0.0
    %448 = vmatpush.msra.mxu0 0.0
    %449 = vmatpush.msra.mxu0 0.0
    %450 = vmatpush.msra.mxu0 0.0
    %451 = vmatpush.msra.mxu0 0.0
    %452 = vmatpush.msra.mxu0 %v101
    %453 = vmatmul.f32.gmra.mxu0 %v432
    %v454 = vpop.f32.mrf.mxu0
    %v455 = vadd.f32 %v426, %v454
    %456 = vmatmul.f32.gmra.mxu0 %v435
    %v457 = vpop.f32.mrf.mxu0
    %v458 = vadd.f32 %v429, %v457
    %459 = vdwg.mxu0
    %460 = vrot.lane.b32.xlu0 %v134, 112
    %v461 = vpop.permute.xlu0 %460
    %462 = vrot.lane.b32.xlu0 %v134, 80
    %v463 = vpop.permute.xlu0 %462
    %v464 = vsel %vm146, %v461, 0
    %v466 = vsel %vm146, %v463, 0
    %468 = vmatpush.xpose.msra.mxu0 0.0
    %469 = vmatpush.xpose.msra.mxu0 0.0
    %470 = vmatpush.xpose.msra.mxu0 0.0
    %471 = vmatpush.xpose.msra.mxu0 0.0
    %472 = vmatpush.xpose.msra.mxu0 0.0
    %473 = vmatpush.xpose.msra.mxu0 0.0
    %474 = vmatpush.xpose.msra.mxu0 0.0
    %475 = vmatpush.xpose.msra.mxu0 0.0
    %476 = vmatpush.xpose.msra.mxu0 0.0
    %477 = vmatpush.xpose.msra.mxu0 0.0
    %478 = vmatpush.xpose.msra.mxu0 0.0
    %479 = vmatpush.xpose.msra.mxu0 0.0
    %480 = vmatpush.xpose.msra.mxu0 0.0
    %481 = vmatpush.xpose.msra.mxu0 0.0
    %482 = vmatpush.xpose.msra.mxu0 0.0
    %483 = vmatpush.xpose.msra.mxu0 %v466
    %484 = vmatmul.f32.gmra.mxu0 %v464
    %v485 = vpop.f32.mrf.mxu0
    %v486 = vadd.f32 %v139, %v485
    %487 = vdwg.mxu0
    %488 = vrot.lane.b32.xlu0 %v137, 112
    %v489 = vpop.permute.xlu0 %488
    %490 = vrot.lane.b32.xlu0 %v137, 80
    %v491 = vpop.permute.xlu0 %490
    %v492 = vsel %vm146, %v489, 0
    %v494 = vsel %vm146, %v491, 0
    %496 = vmatpush.xpose.msra.mxu0 0.0
    %497 = vmatpush.xpose.msra.mxu0 0.0
    %498 = vmatpush.xpose.msra.mxu0 0.0
    %499 = vmatpush.xpose.msra.mxu0 0.0
    %500 = vmatpush.xpose.msra.mxu0 0.0
    %501 = vmatpush.xpose.msra.mxu0 0.0
    %502 = vmatpush.xpose.msra.mxu0 0.0
    %503 = vmatpush.xpose.msra.mxu0 0.0
    %504 = vmatpush.xpose.msra.mxu0 0.0
    %505 = vmatpush.xpose.msra.mxu0 0.0
    %506 = vmatpush.xpose.msra.mxu0 0.0
    %507 = vmatpush.xpose.msra.mxu0 0.0
    %508 = vmatpush.xpose.msra.mxu0 0.0
    %509 = vmatpush.xpose.msra.mxu0 0.0
    %510 = vmatpush.xpose.msra.mxu0 0.0
    %511 = vmatpush.xpose.msra.mxu0 %v494
    %512 = vmatmul.f32.gmra.mxu0 %v492
    %v513 = vpop.f32.mrf.mxu0
    %v514 = vadd.f32 %v140, %v513
    %515 = vdwg.mxu0
    %v516 = vsel %vm146, %v486, -inf
    %517 = vmax.xlane.f32.xlu0 %v516
    %v518 = vpop.xlane.xlu0 %517
    %v519 = vsel %vm146, %v514, -inf
    %520 = vmax.xlane.f32.xlu0 %v519
    %v521 = vpop.xlane.xlu0 %520
    %v522 = vsub.f32 %v486, %v518
    %v523 = vsub.f32 %v514, %v521
    %v524 = vmul.f32 %v522, 1.442695
    %v525 = vpow.pop %v524
    %v526 = vmul.f32 %v523, 1.442695
    %v527 = vpow.pop %v526
    %v528 = vsel %vm146, %v525, 0.0
    %529 = vadd.xlane.f32.xlu0 %v528
    %v530 = vpop.xlane.xlu0 %529
    %v531 = vsel %vm146, %v527, 0.0
    %532 = vadd.xlane.f32.xlu0 %v531
    %v533 = vpop.xlane.xlu0 %532
    %v534 = vrcp.pop %v530
    %v535 = vrcp.pop %v533
    %v536 = vmul.f32 %v525, %v534
    %v537 = vmul.f32 %v527, %v535
    %538 = vrot.lane.b32.xlu0 %v134, 48
    %v539 = vpop.permute.xlu0 %538
    %v542 = vsel %vm146, %v536, 0
    %544 = vmatpush.msra.mxu0 0.0
    %545 = vmatpush.msra.mxu0 0.0
    %546 = vmatpush.msra.mxu0 0.0
    %547 = vmatpush.msra.mxu0 0.0
    %548 = vmatpush.msra.mxu0 0.0
    %549 = vmatpush.msra.mxu0 0.0
    %550 = vmatpush.msra.mxu0 0.0
    %551 = vmatpush.msra.mxu0 0.0
    %552 = vmatpush.msra.mxu0 0.0
    %553 = vmatpush.msra.mxu0 0.0
    %554 = vmatpush.msra.mxu0 0.0
    %555 = vmatpush.msra.mxu0 0.0
    %556 = vmatpush.msra.mxu0 0.0
    %557 = vmatpush.msra.mxu0 0.0
    %558 = vmatpush.msra.mxu0 0.0
    %559 = vmatpush.msra.mxu0 %v539
    %560 = vmatmul.f32.gmra.mxu0 %v542
    %v561 = vpop.f32.mrf.mxu0
    %v562 = vadd.f32 0.0, %v561
    %563 = vdwg.mxu0
    %564 = vrot.lane.b32.xlu0 %v137, 48
    %v565 = vpop.permute.xlu0 %564
    %v568 = vsel %vm146, %v537, 0
    %570 = vmatpush.msra.mxu0 0.0
    %571 = vmatpush.msra.mxu0 0.0
    %572 = vmatpush.msra.mxu0 0.0
    %573 = vmatpush.msra.mxu0 0.0
    %574 = vmatpush.msra.mxu0 0.0
    %575 = vmatpush.msra.mxu0 0.0
    %576 = vmatpush.msra.mxu0 0.0
    %577 = vmatpush.msra.mxu0 0.0
    %578 = vmatpush.msra.mxu0 0.0
    %579 = vmatpush.msra.mxu0 0.0
    %580 = vmatpush.msra.mxu0 0.0
    %581 = vmatpush.msra.mxu0 0.0
    %582 = vmatpush.msra.mxu0 0.0
    %583 = vmatpush.msra.mxu0 0.0
    %584 = vmatpush.msra.mxu0 0.0
    %585 = vmatpush.msra.mxu0 %v565
    %586 = vmatmul.f32.gmra.mxu0 %v568
    %v587 = vpop.f32.mrf.mxu0
    %v588 = vadd.f32 0.0, %v587
    %589 = vdwg.mxu0
    %v591 = vsel %vm146, %v562, 0
    %v594 = vsel %vm146, %v588, 0
    %596 = vmatpush.msra.mxu0 0.0
    %597 = vmatpush.msra.mxu0 0.0
    %598 = vmatpush.msra.mxu0 0.0
    %599 = vmatpush.msra.mxu0 0.0
    %600 = vmatpush.msra.mxu0 0.0
    %601 = vmatpush.msra.mxu0 0.0
    %602 = vmatpush.msra.mxu0 0.0
    %603 = vmatpush.msra.mxu0 0.0
    %604 = vmatpush.msra.mxu0 0.0
    %605 = vmatpush.msra.mxu0 0.0
    %606 = vmatpush.msra.mxu0 0.0
    %607 = vmatpush.msra.mxu0 0.0
    %608 = vmatpush.msra.mxu0 0.0
    %609 = vmatpush.msra.mxu0 0.0
    %610 = vmatpush.msra.mxu0 0.0
    %611 = vmatpush.msra.mxu0 %v103
    %612 = vmatmul.f32.gmra.mxu0 %v591
    %v613 = vpop.f32.mrf.mxu0
    %v614 = vadd.f32 0.0, %v613
    %615 = vmatmul.f32.gmra.mxu0 %v594
    %v616 = vpop.f32.mrf.mxu0
    %v617 = vadd.f32 0.0, %v616
    %618 = vdwg.mxu0
    %v619 = vadd.f32 %v455, %v614
    %v620 = vadd.f32 %v458, %v617
    %621 = vrot.lane.b32.xlu0 %v134, 104
    %v622 = vpop.permute.xlu0 %621
    %623 = vrot.lane.b32.xlu0 %v134, 72
    %v624 = vpop.permute.xlu0 %623
    %v625 = vsel %vm146, %v622, 0
    %v627 = vsel %vm146, %v624, 0
    %629 = vmatpush.xpose.msra.mxu0 0.0
    %630 = vmatpush.xpose.msra.mxu0 0.0
    %631 = vmatpush.xpose.msra.mxu0 0.0
    %632 = vmatpush.xpose.msra.mxu0 0.0
    %633 = vmatpush.xpose.msra.mxu0 0.0
    %634 = vmatpush.xpose.msra.mxu0 0.0
    %635 = vmatpush.xpose.msra.mxu0 0.0
    %636 = vmatpush.xpose.msra.mxu0 0.0
    %637 = vmatpush.xpose.msra.mxu0 0.0
    %638 = vmatpush.xpose.msra.mxu0 0.0
    %639 = vmatpush.xpose.msra.mxu0 0.0
    %640 = vmatpush.xpose.msra.mxu0 0.0
    %641 = vmatpush.xpose.msra.mxu0 0.0
    %642 = vmatpush.xpose.msra.mxu0 0.0
    %643 = vmatpush.xpose.msra.mxu0 0.0
    %644 = vmatpush.xpose.msra.mxu0 %v627
    %645 = vmatmul.f32.gmra.mxu0 %v625
    %v646 = vpop.f32.mrf.mxu0
    %v647 = vadd.f32 %v139, %v646
    %648 = vdwg.mxu0
    %649 = vrot.lane.b32.xlu0 %v137, 104
    %v650 = vpop.permute.xlu0 %649
    %651 = vrot.lane.b32.xlu0 %v137, 72
    %v652 = vpop.permute.xlu0 %651
    %v653 = vsel %vm146, %v650, 0
    %v655 = vsel %vm146, %v652, 0
    %657 = vmatpush.xpose.msra.mxu0 0.0
    %658 = vmatpush.xpose.msra.mxu0 0.0
    %659 = vmatpush.xpose.msra.mxu0 0.0
    %660 = vmatpush.xpose.msra.mxu0 0.0
    %661 = vmatpush.xpose.msra.mxu0 0.0
    %662 = vmatpush.xpose.msra.mxu0 0.0
    %663 = vmatpush.xpose.msra.mxu0 0.0
    %664 = vmatpush.xpose.msra.mxu0 0.0
    %665 = vmatpush.xpose.msra.mxu0 0.0
    %666 = vmatpush.xpose.msra.mxu0 0.0
    %667 = vmatpush.xpose.msra.mxu0 0.0
    %668 = vmatpush.xpose.msra.mxu0 0.0
    %669 = vmatpush.xpose.msra.mxu0 0.0
    %670 = vmatpush.xpose.msra.mxu0 0.0
    %671 = vmatpush.xpose.msra.mxu0 0.0
    %672 = vmatpush.xpose.msra.mxu0 %v655
    %673 = vmatmul.f32.gmra.mxu0 %v653
    %v674 = vpop.f32.mrf.mxu0
    %v675 = vadd.f32 %v140, %v674
    %676 = vdwg.mxu0
    %v677 = vsel %vm146, %v647, -inf
    %678 = vmax.xlane.f32.xlu0 %v677
    %v679 = vpop.xlane.xlu0 %678
    %v680 = vsel %vm146, %v675, -inf
    %681 = vmax.xlane.f32.xlu0 %v680
    %v682 = vpop.xlane.xlu0 %681
    %v683 = vsub.f32 %v647, %v679
    %v684 = vsub.f32 %v675, %v682
    %v685 = vmul.f32 %v683, 1.442695
    %v686 = vpow.pop %v685
    %v687 = vmul.f32 %v684, 1.442695
    %v688 = vpow.pop %v687
    %v689 = vsel %vm146, %v686, 0.0
    %690 = vadd.xlane.f32.xlu0 %v689
    %v691 = vpop.xlane.xlu0 %690
    %v692 = vsel %vm146, %v688, 0.0
    %693 = vadd.xlane.f32.xlu0 %v692
    %v694 = vpop.xlane.xlu0 %693
    %v695 = vrcp.pop %v691
    %v696 = vrcp.pop %v694
    %v697 = vmul.f32 %v686, %v695
    %v698 = vmul.f32 %v688, %v696
    %699 = vrot.lane.b32.xlu0 %v134, 40
    %v700 = vpop.permute.xlu0 %699
    %v703 = vsel %vm146, %v697, 0
    %705 = vmatpush.msra.mxu0 0.0
    %706 = vmatpush.msra.mxu0 0.0
    %707 = vmatpush.msra.mxu0 0.0
    %708 = vmatpush.msra.mxu0 0.0
    %709 = vmatpush.msra.mxu0 0.0
    %710 = vmatpush.msra.mxu0 0.0
    %711 = vmatpush.msra.mxu0 0.0
    %712 = vmatpush.msra.mxu0 0.0
    %713 = vmatpush.msra.mxu0 0.0
    %714 = vmatpush.msra.mxu0 0.0
    %715 = vmatpush.msra.mxu0 0.0
    %716 = vmatpush.msra.mxu0 0.0
    %717 = vmatpush.msra.mxu0 0.0
    %718 = vmatpush.msra.mxu0 0.0
    %719 = vmatpush.msra.mxu0 0.0
    %720 = vmatpush.msra.mxu0 %v700
    %721 = vmatmul.f32.gmra.mxu0 %v703
    %v722 = vpop.f32.mrf.mxu0
    %v723 = vadd.f32 0.0, %v722
    %724 = vdwg.mxu0
    %725 = vrot.lane.b32.xlu0 %v137, 40
    %v726 = vpop.permute.xlu0 %725
    %v729 = vsel %vm146, %v698, 0
    %731 = vmatpush.msra.mxu0 0.0
    %732 = vmatpush.msra.mxu0 0.0
    %733 = vmatpush.msra.mxu0 0.0
    %734 = vmatpush.msra.mxu0 0.0
    %735 = vmatpush.msra.mxu0 0.0
    %736 = vmatpush.msra.mxu0 0.0
    %737 = vmatpush.msra.mxu0 0.0
    %738 = vmatpush.msra.mxu0 0.0
    %739 = vmatpush.msra.mxu0 0.0
    %740 = vmatpush.msra.mxu0 0.0
    %741 = vmatpush.msra.mxu0 0.0
    %742 = vmatpush.msra.mxu0 0.0
    %743 = vmatpush.msra.mxu0 0.0
    %744 = vmatpush.msra.mxu0 0.0
    %745 = vmatpush.msra.mxu0 0.0
    %746 = vmatpush.msra.mxu0 %v726
    %747 = vmatmul.f32.gmra.mxu0 %v729
    %v748 = vpop.f32.mrf.mxu0
    %v749 = vadd.f32 0.0, %v748
    %750 = vdwg.mxu0
    %v752 = vsel %vm146, %v723, 0
    %v755 = vsel %vm146, %v749, 0
    %757 = vmatpush.msra.mxu0 0.0
    %758 = vmatpush.msra.mxu0 0.0
    %759 = vmatpush.msra.mxu0 0.0
    %760 = vmatpush.msra.mxu0 0.0
    %761 = vmatpush.msra.mxu0 0.0
    %762 = vmatpush.msra.mxu0 0.0
    %763 = vmatpush.msra.mxu0 0.0
    %764 = vmatpush.msra.mxu0 0.0
    %765 = vmatpush.msra.mxu0 0.0
    %766 = vmatpush.msra.mxu0 0.0
    %767 = vmatpush.msra.mxu0 0.0
    %768 = vmatpush.msra.mxu0 0.0
    %769 = vmatpush.msra.mxu0 0.0
    %770 = vmatpush.msra.mxu0 0.0
    %771 = vmatpush.msra.mxu0 0.0
    %772 = vmatpush.msra.mxu0 %v104
    %773 = vmatmul.f32.gmra.mxu0 %v752
    %v774 = vpop.f32.mrf.mxu0
    %v775 = vadd.f32 0.0, %v774
    %776 = vmatmul.f32.gmra.mxu0 %v755
    %v777 = vpop.f32.mrf.mxu0
    %v778 = vadd.f32 0.0, %v777
    %779 = vdwg.mxu0
    %v780 = vadd.f32 %v619, %v775
    %v781 = vadd.f32 %v620, %v778
    %v782 = vadd.f32 %v95, %v780
    %v783 = vadd.f32 %v96, %v781
    %v784 = vperm.slane %v100, 1
    %v785 = vadd.f32 %v782, %v784
    %v786 = vadd.f32 %v783, %v784
    %v787 = vsel %vm39, %v785, 0.0
    %788 = vadd.xlane.f32.xlu0 %v787
    %v789 = vpop.xlane.xlu0 %788
    %v790 = vsel %vm39, %v786, 0.0
    %791 = vadd.xlane.f32.xlu0 %v790
    %v792 = vpop.xlane.xlu0 %791
    %v793 = vmul.f32 %v789, %v52
    %v794 = vmul.f32 %v792, %v52
    %v795 = vsub.f32 %v785, %v793
    %v796 = vsub.f32 %v786, %v794
    %v797 = vmul.f32 %v795, %v795
    %v798 = vmul.f32 %v796, %v796
    %v799 = vsel %vm39, %v797, 0.0
    %800 = vadd.xlane.f32.xlu0 %v799
    %v801 = vpop.xlane.xlu0 %800
    %v802 = vsel %vm39, %v798, 0.0
    %803 = vadd.xlane.f32.xlu0 %v802
    %v804 = vpop.xlane.xlu0 %803
    %v805 = vmul.f32 %v801, %v52
    %v806 = vmul.f32 %v804, %v52
    %v807 = vadd.f32 %v805, 1e-05
    %v808 = vadd.f32 %v806, 1e-05
    %v809 = vrsqrt.pop %v807
    %v810 = vmul.f32 %v809, %v807
    %v811 = vmul.f32 %v810, %v809
    %v812 = vmul.f32 0.5, %v811
    %v813 = vsub.f32 1.5, %v812
    %v814 = vmul.f32 %v809, %v813
    %vm815 = vweird.f32 %v807
    %vm816 = vweird.f32 %v809
    %vm817 = vmor %vm815, %vm816
    %v818 = vsel %vm817, %v809, %v814
    %v819 = vrsqrt.pop %v808
    %v820 = vmul.f32 %v819, %v808
    %v821 = vmul.f32 %v820, %v819
    %v822 = vmul.f32 0.5, %v821
    %v823 = vsub.f32 1.5, %v822
    %v824 = vmul.f32 %v819, %v823
    %vm825 = vweird.f32 %v808
    %vm826 = vweird.f32 %v819
    %vm827 = vmor %vm825, %vm826
    %v828 = vsel %vm827, %v819, %v824
    %v829 = vmul.f32 %v795, %v818
    %v830 = vmul.f32 %v796, %v828
    %v831 = vperm.slane %v100, 2
    %v832 = vmul.f32 %v829, %v831
    %v833 = vmul.f32 %v830, %v831
    %v834 = vperm.slane %v100, 3
    %v835 = vadd.f32 %v832, %v834
    %v836 = vadd.f32 %v833, %v834
    %v837 = vld [vmem:[%s5] sm:$0xff]
    %v838 = vld [vmem:[%s5 + $0x8] sm:$0xff]
    %v839 = vld [vmem:[%s5 + $0x10] sm:$0xff]
    %v840 = vld [vmem:[%s5 + $0x18] sm:$0xff]
    %v841 = vperm.slane %v100, 4
    %v843 = vsel %vm39, %v835, 0
    %v846 = vsel %vm39, %v836, 0
    %848 = vmatpush.msra.mxu0 0.0
    %849 = vmatpush.msra.mxu0 0.0
    %850 = vmatpush.msra.mxu0 0.0
    %851 = vmatpush.msra.mxu0 0.0
    %852 = vmatpush.msra.mxu0 0.0
    %853 = vmatpush.msra.mxu0 0.0
    %854 = vmatpush.msra.mxu0 0.0
    %855 = vmatpush.msra.mxu0 0.0
    %856 = vmatpush.msra.mxu0 0.0
    %857 = vmatpush.msra.mxu0 0.0
    %858 = vmatpush.msra.mxu0 0.0
    %859 = vmatpush.msra.mxu0 0.0
    %860 = vmatpush.msra.mxu0 %v840
    %861 = vmatpush.msra.mxu0 %v839
    %862 = vmatpush.msra.mxu0 %v838
    %863 = vmatpush.msra.mxu0 %v837
    %864 = vmatmul.f32.gmra.mxu0 %v843
    %v865 = vpop.f32.mrf.mxu0
    %v866 = vadd.f32 %v841, %v865
    %867 = vmatmul.f32.gmra.mxu0 %v846
    %v868 = vpop.f32.mrf.mxu0
    %v869 = vadd.f32 %v841, %v868
    %870 = vdwg.mxu0
    %v871 = vmul.f32 %v866, 0.5
    %v872 = vmul.f32 %v869, 0.5
    %v873 = vmul.f32 %v866, 0.044715
    %v874 = vmul.f32 %v869, 0.044715
    %v875 = vmul.f32 %v873, %v866
    %v876 = vmul.f32 %v874, %v869
    %v877 = vmul.f32 %v875, %v866
    %v878 = vmul.f32 %v876, %v869
    %v879 = vadd.f32 %v866, %v877
    %v880 = vadd.f32 %v869, %v878
    %v881 = vmul.f32 %v879, 0.7978846
    %v882 = vmul.f32 %v880, 0.7978846
    %v883 = vtanh.pop %v881
    %v884 = vtanh.pop %v882
    %v885 = vadd.f32 %v883, 1.0
    %v886 = vadd.f32 %v884, 1.0
    %v887 = vmul.f32 %v871, %v885
    %v888 = vmul.f32 %v872, %v886
    %v889 = vld [vmem:[%s6] sm:$0xff]
    %v890 = vld [vmem:[%s6 + $0x8] sm:$0xff]
    %v891 = vld [vmem:[%s6 + $0x10] sm:$0xff]
    %v892 = vld [vmem:[%s6 + $0x18] sm:$0xff]
    %v893 = vld [vmem:[%s6 + $0x20] sm:$0xff]
    %v894 = vld [vmem:[%s6 + $0x28] sm:$0xff]
    %v895 = vld [vmem:[%s6 + $0x30] sm:$0xff]
    %v896 = vld [vmem:[%s6 + $0x38] sm:$0xff]
    %v897 = vperm.slane %v100, 5
    %vm898 = vcmask 523264
    %v900 = vsel %vm898, %v887, 0
    %v903 = vsel %vm898, %v888, 0
    %905 = vmatpush.msra.mxu0 0.0
    %906 = vmatpush.msra.mxu0 0.0
    %907 = vmatpush.msra.mxu0 0.0
    %908 = vmatpush.msra.mxu0 0.0
    %909 = vmatpush.msra.mxu0 0.0
    %910 = vmatpush.msra.mxu0 0.0
    %911 = vmatpush.msra.mxu0 0.0
    %912 = vmatpush.msra.mxu0 0.0
    %913 = vmatpush.msra.mxu0 %v896
    %914 = vmatpush.msra.mxu0 %v895
    %915 = vmatpush.msra.mxu0 %v894
    %916 = vmatpush.msra.mxu0 %v893
    %917 = vmatpush.msra.mxu0 %v892
    %918 = vmatpush.msra.mxu0 %v891
    %919 = vmatpush.msra.mxu0 %v890
    %920 = vmatpush.msra.mxu0 %v889
    %921 = vmatmul.f32.gmra.mxu0 %v900
    %v922 = vpop.f32.mrf.mxu0
    %v923 = vadd.f32 %v897, %v922
    %924 = vmatmul.f32.gmra.mxu0 %v903
    %v925 = vpop.f32.mrf.mxu0
    %v926 = vadd.f32 %v897, %v925
    %927 = vdwg.mxu0
    %v928 = vadd.f32 %v835, %v923
    %v929 = vadd.f32 %v836, %v926
    %v930 = vsel %vm39, %v928, 0.0
    %931 = vadd.xlane.f32.xlu0 %v930
    %v932 = vpop.xlane.xlu0 %931
    %v933 = vsel %vm39, %v929, 0.0
    %934 = vadd.xlane.f32.xlu0 %v933
    %v935 = vpop.xlane.xlu0 %934
    %v936 = vmul.f32 %v932, %v52
    %v937 = vmul.f32 %v935, %v52
    %v938 = vsub.f32 %v928, %v936
    %v939 = vsub.f32 %v929, %v937
    %v940 = vmul.f32 %v938, %v938
    %v941 = vmul.f32 %v939, %v939
    %v942 = vsel %vm39, %v940, 0.0
    %943 = vadd.xlane.f32.xlu0 %v942
    %v944 = vpop.xlane.xlu0 %943
    %v945 = vsel %vm39, %v941, 0.0
    %946 = vadd.xlane.f32.xlu0 %v945
    %v947 = vpop.xlane.xlu0 %946
    %v948 = vmul.f32 %v944, %v52
    %v949 = vmul.f32 %v947, %v52
    %v950 = vadd.f32 %v948, 1e-05
    %v951 = vadd.f32 %v949, 1e-05
    %v952 = vrsqrt.pop %v950
    %v953 = vmul.f32 %v952, %v950
    %v954 = vmul.f32 %v953, %v952
    %v955 = vmul.f32 0.5, %v954
    %v956 = vsub.f32 1.5, %v955
    %v957 = vmul.f32 %v952, %v956
    %vm958 = vweird.f32 %v950
    %vm959 = vweird.f32 %v952
    %vm960 = vmor %vm958, %vm959
    %v961 = vsel %vm960, %v952, %v957
    %v962 = vrsqrt.pop %v951
    %v963 = vmul.f32 %v962, %v951
    %v964 = vmul.f32 %v963, %v962
    %v965 = vmul.f32 0.5, %v964
    %v966 = vsub.f32 1.5, %v965
    %v967 = vmul.f32 %v962, %v966
    %vm968 = vweird.f32 %v951
    %vm969 = vweird.f32 %v962
    %vm970 = vmor %vm968, %vm969
    %v971 = vsel %vm970, %v962, %v967
    %v972 = vmul.f32 %v938, %v961
    %v973 = vmul.f32 %v939, %v971
    %v974 = vperm.slane %v100, 6
    %v975 = vmul.f32 %v972, %v974
    %v976 = vmul.f32 %v973, %v974
    %v977 = vperm.slane %v100, 7
    %v978 = vadd.f32 %v975, %v977
    %v979 = vadd.f32 %v976, %v977
    %s980 = scalar_lea.vmem %s7, 8
    %v981 = vld [vmem:[%s980] sm:$0xff]
    %s982 = scalar_lea.vmem %s4, 32
    %v983 = vld [vmem:[%s982] sm:$0xff]
    %v984 = vld [vmem:[%s982 + $0x8] sm:$0xff]
    %v985 = vld [vmem:[%s982 + $0x10] sm:$0xff]
    %v986 = vld [vmem:[%s982 + $0x18] sm:$0xff]
    %s987 = scalar_lea.vmem %s3, 32
    %v988 = vld [vmem:[%s987] sm:$0xff]
    %v989 = vld [vmem:[%s987 + $0x8] sm:$0xff]
    %v990 = vld [vmem:[%s987 + $0x10] sm:$0xff]
    %v991 = vld [vmem:[%s987 + $0x18] sm:$0xff]
    %v992 = vperm.slane %v981, 0
    %v994 = vsel %vm39, %v978, 0
    %v997 = vsel %vm39, %v979, 0
    %999 = vmatpush.msra.mxu0 0.0
    %1000 = vmatpush.msra.mxu0 0.0
    %1001 = vmatpush.msra.mxu0 0.0
    %1002 = vmatpush.msra.mxu0 0.0
    %1003 = vmatpush.msra.mxu0 0.0
    %1004 = vmatpush.msra.mxu0 0.0
    %1005 = vmatpush.msra.mxu0 0.0
    %1006 = vmatpush.msra.mxu0 0.0
    %1007 = vmatpush.msra.mxu0 0.0
    %1008 = vmatpush.msra.mxu0 0.0
    %1009 = vmatpush.msra.mxu0 0.0
    %1010 = vmatpush.msra.mxu0 0.0
    %1011 = vmatpush.msra.mxu0 %v991
    %1012 = vmatpush.msra.mxu0 %v990
    %1013 = vmatpush.msra.mxu0 %v989
    %1014 = vmatpush.msra.mxu0 %v988
    %1015 = vmatmul.f32.gmra.mxu0 %v994
    %v1016 = vpop.f32.mrf.mxu0
    %v1017 = vadd.f32 %v992, %v1016
    %1018 = vmatmul.f32.gmra.mxu0 %v997
    %v1019 = vpop.f32.mrf.mxu0
    %v1020 = vadd.f32 %v992, %v1019
    %1021 = vdwg.mxu0
    %1023 = vrot.lane.b32.xlu0 %v1017, 96
    %v1024 = vpop.permute.xlu0 %1023
    %v1025 = vsel %vm146, %v1017, 0
    %v1027 = vsel %vm146, %v1024, 0
    %1029 = vmatpush.xpose.msra.mxu0 0.0
    %1030 = vmatpush.xpose.msra.mxu0 0.0
    %1031 = vmatpush.xpose.msra.mxu0 0.0
    %1032 = vmatpush.xpose.msra.mxu0 0.0
    %1033 = vmatpush.xpose.msra.mxu0 0.0
    %1034 = vmatpush.xpose.msra.mxu0 0.0
    %1035 = vmatpush.xpose.msra.mxu0 0.0
    %1036 = vmatpush.xpose.msra.mxu0 0.0
    %1037 = vmatpush.xpose.msra.mxu0 0.0
    %1038 = vmatpush.xpose.msra.mxu0 0.0
    %1039 = vmatpush.xpose.msra.mxu0 0.0
    %1040 = vmatpush.xpose.msra.mxu0 0.0
    %1041 = vmatpush.xpose.msra.mxu0 0.0
    %1042 = vmatpush.xpose.msra.mxu0 0.0
    %1043 = vmatpush.xpose.msra.mxu0 0.0
    %1044 = vmatpush.xpose.msra.mxu0 %v1027
    %1045 = vmatmul.f32.gmra.mxu0 %v1025
    %v1046 = vpop.f32.mrf.mxu0
    %v1047 = vadd.f32 %v139, %v1046
    %1048 = vdwg.mxu0
    %1050 = vrot.lane.b32.xlu0 %v1020, 96
    %v1051 = vpop.permute.xlu0 %1050
    %v1052 = vsel %vm146, %v1020, 0
    %v1054 = vsel %vm146, %v1051, 0
    %1056 = vmatpush.xpose.msra.mxu0 0.0
    %1057 = vmatpush.xpose.msra.mxu0 0.0
    %1058 = vmatpush.xpose.msra.mxu0 0.0
    %1059 = vmatpush.xpose.msra.mxu0 0.0
    %1060 = vmatpush.xpose.msra.mxu0 0.0
    %1061 = vmatpush.xpose.msra.mxu0 0.0
    %1062 = vmatpush.xpose.msra.mxu0 0.0
    %1063 = vmatpush.xpose.msra.mxu0 0.0
    %1064 = vmatpush.xpose.msra.mxu0 0.0
    %1065 = vmatpush.xpose.msra.mxu0 0.0
    %1066 = vmatpush.xpose.msra.mxu0 0.0
    %1067 = vmatpush.xpose.msra.mxu0 0.0
    %1068 = vmatpush.xpose.msra.mxu0 0.0
    %1069 = vmatpush.xpose.msra.mxu0 0.0
    %1070 = vmatpush.xpose.msra.mxu0 0.0
    %1071 = vmatpush.xpose.msra.mxu0 %v1054
    %1072 = vmatmul.f32.gmra.mxu0 %v1052
    %v1073 = vpop.f32.mrf.mxu0
    %v1074 = vadd.f32 %v140, %v1073
    %1075 = vdwg.mxu0
    %v1076 = vsel %vm146, %v1047, -inf
    %1077 = vmax.xlane.f32.xlu0 %v1076
    %v1078 = vpop.xlane.xlu0 %1077
    %v1079 = vsel %vm146, %v1074, -inf
    %1080 = vmax.xlane.f32.xlu0 %v1079
    %v1081 = vpop.xlane.xlu0 %1080
    %v1082 = vsub.f32 %v1047, %v1078
    %v1083 = vsub.f32 %v1074, %v1081
    %v1084 = vmul.f32 %v1082, 1.442695
    %v1085 = vpow.pop %v1084
    %v1086 = vmul.f32 %v1083, 1.442695
    %v1087 = vpow.pop %v1086
    %v1088 = vsel %vm146, %v1085, 0.0
    %1089 = vadd.xlane.f32.xlu0 %v1088
    %v1090 = vpop.xlane.xlu0 %1089
    %v1091 = vsel %vm146, %v1087, 0.0
    %1092 = vadd.xlane.f32.xlu0 %v1091
    %v1093 = vpop.xlane.xlu0 %1092
    %v1094 = vrcp.pop %v1090
    %v1095 = vrcp.pop %v1093
    %v1096 = vmul.f32 %v1085, %v1094
    %v1097 = vmul.f32 %v1087, %v1095
    %1098 = vrot.lane.b32.xlu0 %v1017, 64
    %v1099 = vpop.permute.xlu0 %1098
    %v1102 = vsel %vm146, %v1096, 0
    %1104 = vmatpush.msra.mxu0 0.0
    %1105 = vmatpush.msra.mxu0 0.0
    %1106 = vmatpush.msra.mxu0 0.0
    %1107 = vmatpush.msra.mxu0 0.0
    %1108 = vmatpush.msra.mxu0 0.0
    %1109 = vmatpush.msra.mxu0 0.0
    %1110 = vmatpush.msra.mxu0 0.0
    %1111 = vmatpush.msra.mxu0 0.0
    %1112 = vmatpush.msra.mxu0 0.0
    %1113 = vmatpush.msra.mxu0 0.0
    %1114 = vmatpush.msra.mxu0 0.0
    %1115 = vmatpush.msra.mxu0 0.0
    %1116 = vmatpush.msra.mxu0 0.0
    %1117 = vmatpush.msra.mxu0 0.0
    %1118 = vmatpush.msra.mxu0 0.0
    %1119 = vmatpush.msra.mxu0 %v1099
    %1120 = vmatmul.f32.gmra.mxu0 %v1102
    %v1121 = vpop.f32.mrf.mxu0
    %v1122 = vadd.f32 0.0, %v1121
    %1123 = vdwg.mxu0
    %1124 = vrot.lane.b32.xlu0 %v1020, 64
    %v1125 = vpop.permute.xlu0 %1124
    %v1128 = vsel %vm146, %v1097, 0
    %1130 = vmatpush.msra.mxu0 0.0
    %1131 = vmatpush.msra.mxu0 0.0
    %1132 = vmatpush.msra.mxu0 0.0
    %1133 = vmatpush.msra.mxu0 0.0
    %1134 = vmatpush.msra.mxu0 0.0
    %1135 = vmatpush.msra.mxu0 0.0
    %1136 = vmatpush.msra.mxu0 0.0
    %1137 = vmatpush.msra.mxu0 0.0
    %1138 = vmatpush.msra.mxu0 0.0
    %1139 = vmatpush.msra.mxu0 0.0
    %1140 = vmatpush.msra.mxu0 0.0
    %1141 = vmatpush.msra.mxu0 0.0
    %1142 = vmatpush.msra.mxu0 0.0
    %1143 = vmatpush.msra.mxu0 0.0
    %1144 = vmatpush.msra.mxu0 0.0
    %1145 = vmatpush.msra.mxu0 %v1125
    %1146 = vmatmul.f32.gmra.mxu0 %v1128
    %v1147 = vpop.f32.mrf.mxu0
    %v1148 = vadd.f32 0.0, %v1147
    %1149 = vdwg.mxu0
    %1150 = vrot.lane.b32.xlu0 %v1017, 120
    %v1151 = vpop.permute.xlu0 %1150
    %1152 = vrot.lane.b32.xlu0 %v1017, 88
    %v1153 = vpop.permute.xlu0 %1152
    %v1154 = vsel %vm146, %v1151, 0
    %v1156 = vsel %vm146, %v1153, 0
    %1158 = vmatpush.xpose.msra.mxu0 0.0
    %1159 = vmatpush.xpose.msra.mxu0 0.0
    %1160 = vmatpush.xpose.msra.mxu0 0.0
    %1161 = vmatpush.xpose.msra.mxu0 0.0
    %1162 = vmatpush.xpose.msra.mxu0 0.0
    %1163 = vmatpush.xpose.msra.mxu0 0.0
    %1164 = vmatpush.xpose.msra.mxu0 0.0
    %1165 = vmatpush.xpose.msra.mxu0 0.0
    %1166 = vmatpush.xpose.msra.mxu0 0.0
    %1167 = vmatpush.xpose.msra.mxu0 0.0
    %1168 = vmatpush.xpose.msra.mxu0 0.0
    %1169 = vmatpush.xpose.msra.mxu0 0.0
    %1170 = vmatpush.xpose.msra.mxu0 0.0
    %1171 = vmatpush.xpose.msra.mxu0 0.0
    %1172 = vmatpush.xpose.msra.mxu0 0.0
    %1173 = vmatpush.xpose.msra.mxu0 %v1156
    %1174 = vmatmul.f32.gmra.mxu0 %v1154
    %v1175 = vpop.f32.mrf.mxu0
    %v1176 = vadd.f32 %v139, %v1175
    %1177 = vdwg.mxu0
    %1178 = vrot.lane.b32.xlu0 %v1020, 120
    %v1179 = vpop.permute.xlu0 %1178
    %1180 = vrot.lane.b32.xlu0 %v1020, 88
    %v1181 = vpop.permute.xlu0 %1180
    %v1182 = vsel %vm146, %v1179, 0
    %v1184 = vsel %vm146, %v1181, 0
    %1186 = vmatpush.xpose.msra.mxu0 0.0
    %1187 = vmatpush.xpose.msra.mxu0 0.0
    %1188 = vmatpush.xpose.msra.mxu0 0.0
    %1189 = vmatpush.xpose.msra.mxu0 0.0
    %1190 = vmatpush.xpose.msra.mxu0 0.0
    %1191 = vmatpush.xpose.msra.mxu0 0.0
    %1192 = vmatpush.xpose.msra.mxu0 0.0
    %1193 = vmatpush.xpose.msra.mxu0 0.0
    %1194 = vmatpush.xpose.msra.mxu0 0.0
    %1195 = vmatpush.xpose.msra.mxu0 0.0
    %1196 = vmatpush.xpose.msra.mxu0 0.0
    %1197 = vmatpush.xpose.msra.mxu0 0.0
    %1198 = vmatpush.xpose.msra.mxu0 0.0
    %1199 = vmatpush.xpose.msra.mxu0 0.0
    %1200 = vmatpush.xpose.msra.mxu0 0.0
    %1201 = vmatpush.xpose.msra.mxu0 %v1184
    %1202 = vmatmul.f32.gmra.mxu0 %v1182
    %v1203 = vpop.f32.mrf.mxu0
    %v1204 = vadd.f32 %v140, %v1203
    %1205 = vdwg.mxu0
    %v1206 = vsel %vm146, %v1176, -inf
    %1207 = vmax.xlane.f32.xlu0 %v1206
    %v1208 = vpop.xlane.xlu0 %1207
    %v1209 = vsel %vm146, %v1204, -inf
    %1210 = vmax.xlane.f32.xlu0 %v1209
    %v1211 = vpop.xlane.xlu0 %1210
    %v1212 = vsub.f32 %v1176, %v1208
    %v1213 = vsub.f32 %v1204, %v1211
    %v1214 = vmul.f32 %v1212, 1.442695
    %v1215 = vpow.pop %v1214
    %v1216 = vmul.f32 %v1213, 1.442695
    %v1217 = vpow.pop %v1216
    %v1218 = vsel %vm146, %v1215, 0.0
    %1219 = vadd.xlane.f32.xlu0 %v1218
    %v1220 = vpop.xlane.xlu0 %1219
    %v1221 = vsel %vm146, %v1217, 0.0
    %1222 = vadd.xlane.f32.xlu0 %v1221
    %v1223 = vpop.xlane.xlu0 %1222
    %v1224 = vrcp.pop %v1220
    %v1225 = vrcp.pop %v1223
    %v1226 = vmul.f32 %v1215, %v1224
    %v1227 = vmul.f32 %v1217, %v1225
    %1228 = vrot.lane.b32.xlu0 %v1017, 56
    %v1229 = vpop.permute.xlu0 %1228
    %v1232 = vsel %vm146, %v1226, 0
    %1234 = vmatpush.msra.mxu0 0.0
    %1235 = vmatpush.msra.mxu0 0.0
    %1236 = vmatpush.msra.mxu0 0.0
    %1237 = vmatpush.msra.mxu0 0.0
    %1238 = vmatpush.msra.mxu0 0.0
    %1239 = vmatpush.msra.mxu0 0.0
    %1240 = vmatpush.msra.mxu0 0.0
    %1241 = vmatpush.msra.mxu0 0.0
    %1242 = vmatpush.msra.mxu0 0.0
    %1243 = vmatpush.msra.mxu0 0.0
    %1244 = vmatpush.msra.mxu0 0.0
    %1245 = vmatpush.msra.mxu0 0.0
    %1246 = vmatpush.msra.mxu0 0.0
    %1247 = vmatpush.msra.mxu0 0.0
    %1248 = vmatpush.msra.mxu0 0.0
    %1249 = vmatpush.msra.mxu0 %v1229
    %1250 = vmatmul.f32.gmra.mxu0 %v1232
    %v1251 = vpop.f32.mrf.mxu0
    %v1252 = vadd.f32 0.0, %v1251
    %1253 = vdwg.mxu0
    %1254 = vrot.lane.b32.xlu0 %v1020, 56
    %v1255 = vpop.permute.xlu0 %1254
    %v1258 = vsel %vm146, %v1227, 0
    %1260 = vmatpush.msra.mxu0 0.0
    %1261 = vmatpush.msra.mxu0 0.0
    %1262 = vmatpush.msra.mxu0 0.0
    %1263 = vmatpush.msra.mxu0 0.0
    %1264 = vmatpush.msra.mxu0 0.0
    %1265 = vmatpush.msra.mxu0 0.0
    %1266 = vmatpush.msra.mxu0 0.0
    %1267 = vmatpush.msra.mxu0 0.0
    %1268 = vmatpush.msra.mxu0 0.0
    %1269 = vmatpush.msra.mxu0 0.0
    %1270 = vmatpush.msra.mxu0 0.0
    %1271 = vmatpush.msra.mxu0 0.0
    %1272 = vmatpush.msra.mxu0 0.0
    %1273 = vmatpush.msra.mxu0 0.0
    %1274 = vmatpush.msra.mxu0 0.0
    %1275 = vmatpush.msra.mxu0 %v1255
    %1276 = vmatmul.f32.gmra.mxu0 %v1258
    %v1277 = vpop.f32.mrf.mxu0
    %v1278 = vadd.f32 0.0, %v1277
    %1279 = vdwg.mxu0
    %v1281 = vsel %vm146, %v1252, 0
    %v1284 = vsel %vm146, %v1278, 0
    %1286 = vmatpush.msra.mxu0 0.0
    %1287 = vmatpush.msra.mxu0 0.0
    %1288 = vmatpush.msra.mxu0 0.0
    %1289 = vmatpush.msra.mxu0 0.0
    %1290 = vmatpush.msra.mxu0 0.0
    %1291 = vmatpush.msra.mxu0 0.0
    %1292 = vmatpush.msra.mxu0 0.0
    %1293 = vmatpush.msra.mxu0 0.0
    %1294 = vmatpush.msra.mxu0 0.0
    %1295 = vmatpush.msra.mxu0 0.0
    %1296 = vmatpush.msra.mxu0 0.0
    %1297 = vmatpush.msra.mxu0 0.0
    %1298 = vmatpush.msra.mxu0 0.0
    %1299 = vmatpush.msra.mxu0 0.0
    %1300 = vmatpush.msra.mxu0 0.0
    %1301 = vmatpush.msra.mxu0 %v984
    %1302 = vmatmul.f32.gmra.mxu0 %v1281
    %v1303 = vpop.f32.mrf.mxu0
    %v1304 = vadd.f32 0.0, %v1303
    %1305 = vmatmul.f32.gmra.mxu0 %v1284
    %v1306 = vpop.f32.mrf.mxu0
    %v1307 = vadd.f32 0.0, %v1306
    %1308 = vdwg.mxu0
    %v1310 = vsel %vm146, %v1122, 0
    %v1313 = vsel %vm146, %v1148, 0
    %1315 = vmatpush.msra.mxu0 0.0
    %1316 = vmatpush.msra.mxu0 0.0
    %1317 = vmatpush.msra.mxu0 0.0
    %1318 = vmatpush.msra.mxu0 0.0
    %1319 = vmatpush.msra.mxu0 0.0
    %1320 = vmatpush.msra.mxu0 0.0
    %1321 = vmatpush.msra.mxu0 0.0
    %1322 = vmatpush.msra.mxu0 0.0
    %1323 = vmatpush.msra.mxu0 0.0
    %1324 = vmatpush.msra.mxu0 0.0
    %1325 = vmatpush.msra.mxu0 0.0
    %1326 = vmatpush.msra.mxu0 0.0
    %1327 = vmatpush.msra.mxu0 0.0
    %1328 = vmatpush.msra.mxu0 0.0
    %1329 = vmatpush.msra.mxu0 0.0
    %1330 = vmatpush.msra.mxu0 %v983
    %1331 = vmatmul.f32.gmra.mxu0 %v1310
    %v1332 = vpop.f32.mrf.mxu0
    %v1333 = vadd.f32 %v1304, %v1332
    %1334 = vmatmul.f32.gmra.mxu0 %v1313
    %v1335 = vpop.f32.mrf.mxu0
    %v1336 = vadd.f32 %v1307, %v1335
    %1337 = vdwg.mxu0
    %1338 = vrot.lane.b32.xlu0 %v1017, 112
    %v1339 = vpop.permute.xlu0 %1338
    %1340 = vrot.lane.b32.xlu0 %v1017, 80
    %v1341 = vpop.permute.xlu0 %1340
    %v1342 = vsel %vm146, %v1339, 0
    %v1344 = vsel %vm146, %v1341, 0
    %1346 = vmatpush.xpose.msra.mxu0 0.0
    %1347 = vmatpush.xpose.msra.mxu0 0.0
    %1348 = vmatpush.xpose.msra.mxu0 0.0
    %1349 = vmatpush.xpose.msra.mxu0 0.0
    %1350 = vmatpush.xpose.msra.mxu0 0.0
    %1351 = vmatpush.xpose.msra.mxu0 0.0
    %1352 = vmatpush.xpose.msra.mxu0 0.0
    %1353 = vmatpush.xpose.msra.mxu0 0.0
    %1354 = vmatpush.xpose.msra.mxu0 0.0
    %1355 = vmatpush.xpose.msra.mxu0 0.0
    %1356 = vmatpush.xpose.msra.mxu0 0.0
    %1357 = vmatpush.xpose.msra.mxu0 0.0
    %1358 = vmatpush.xpose.msra.mxu0 0.0
    %1359 = vmatpush.xpose.msra.mxu0 0.0
    %1360 = vmatpush.xpose.msra.mxu0 0.0
    %1361 = vmatpush.xpose.msra.mxu0 %v1344
    %1362 = vmatmul.f32.gmra.mxu0 %v1342
    %v1363 = vpop.f32.mrf.mxu0
    %v1364 = vadd.f32 %v139, %v1363
    %1365 = vdwg.mxu0
    %1366 = vrot.lane.b32.xlu0 %v1020, 112
    %v1367 = vpop.permute.xlu0 %1366
    %1368 = vrot.lane.b32.xlu0 %v1020, 80
    %v1369 = vpop.permute.xlu0 %1368
    %v1370 = vsel %vm146, %v1367, 0
    %v1372 = vsel %vm146, %v1369, 0
    %1374 = vmatpush.xpose.msra.mxu0 0.0
    %1375 = vmatpush.xpose.msra.mxu0 0.0
    %1376 = vmatpush.xpose.msra.mxu0 0.0
    %1377 = vmatpush.xpose.msra.mxu0 0.0
    %1378 = vmatpush.xpose.msra.mxu0 0.0
    %1379 = vmatpush.xpose.msra.mxu0 0.0
    %1380 = vmatpush.xpose.msra.mxu0 0.0
    %1381 = vmatpush.xpose.msra.mxu0 0.0
    %1382 = vmatpush.xpose.msra.mxu0 0.0
    %1383 = vmatpush.xpose.msra.mxu0 0.0
    %1384 = vmatpush.xpose.msra.mxu0 0.0
    %1385 = vmatpush.xpose.msra.mxu0 0.0
    %1386 = vmatpush.xpose.msra.mxu0 0.0
    %1387 = vmatpush.xpose.msra.mxu0 0.0
    %1388 = vmatpush.xpose.msra.mxu0 0.0
    %1389 = vmatpush.xpose.msra.mxu0 %v1372
    %1390 = vmatmul.f32.gmra.mxu0 %v1370
    %v1391 = vpop.f32.mrf.mxu0
    %v1392 = vadd.f32 %v140, %v1391
    %1393 = vdwg.mxu0
    %v1394 = vsel %vm146, %v1364, -inf
    %1395 = vmax.xlane.f32.xlu0 %v1394
    %v1396 = vpop.xlane.xlu0 %1395
    %v1397 = vsel %vm146, %v1392, -inf
    %1398 = vmax.xlane.f32.xlu0 %v1397
    %v1399 = vpop.xlane.xlu0 %1398
    %v1400 = vsub.f32 %v1364, %v1396
    %v1401 = vsub.f32 %v1392, %v1399
    %v1402 = vmul.f32 %v1400, 1.442695
    %v1403 = vpow.pop %v1402
    %v1404 = vmul.f32 %v1401, 1.442695
    %v1405 = vpow.pop %v1404
    %v1406 = vsel %vm146, %v1403, 0.0
    %1407 = vadd.xlane.f32.xlu0 %v1406
    %v1408 = vpop.xlane.xlu0 %1407
    %v1409 = vsel %vm146, %v1405, 0.0
    %1410 = vadd.xlane.f32.xlu0 %v1409
    %v1411 = vpop.xlane.xlu0 %1410
    %v1412 = vrcp.pop %v1408
    %v1413 = vrcp.pop %v1411
    %v1414 = vmul.f32 %v1403, %v1412
    %v1415 = vmul.f32 %v1405, %v1413
    %1416 = vrot.lane.b32.xlu0 %v1017, 48
    %v1417 = vpop.permute.xlu0 %1416
    %v1420 = vsel %vm146, %v1414, 0
    %1422 = vmatpush.msra.mxu0 0.0
    %1423 = vmatpush.msra.mxu0 0.0
    %1424 = vmatpush.msra.mxu0 0.0
    %1425 = vmatpush.msra.mxu0 0.0
    %1426 = vmatpush.msra.mxu0 0.0
    %1427 = vmatpush.msra.mxu0 0.0
    %1428 = vmatpush.msra.mxu0 0.0
    %1429 = vmatpush.msra.mxu0 0.0
    %1430 = vmatpush.msra.mxu0 0.0
    %1431 = vmatpush.msra.mxu0 0.0
    %1432 = vmatpush.msra.mxu0 0.0
    %1433 = vmatpush.msra.mxu0 0.0
    %1434 = vmatpush.msra.mxu0 0.0
    %1435 = vmatpush.msra.mxu0 0.0
    %1436 = vmatpush.msra.mxu0 0.0
    %1437 = vmatpush.msra.mxu0 %v1417
    %1438 = vmatmul.f32.gmra.mxu0 %v1420
    %v1439 = vpop.f32.mrf.mxu0
    %v1440 = vadd.f32 0.0, %v1439
    %1441 = vdwg.mxu0
    %1442 = vrot.lane.b32.xlu0 %v1020, 48
    %v1443 = vpop.permute.xlu0 %1442
    %v1446 = vsel %vm146, %v1415, 0
    %1448 = vmatpush.msra.mxu0 0.0
    %1449 = vmatpush.msra.mxu0 0.0
    %1450 = vmatpush.msra.mxu0 0.0
    %1451 = vmatpush.msra.mxu0 0.0
    %1452 = vmatpush.msra.mxu0 0.0
    %1453 = vmatpush.msra.mxu0 0.0
    %1454 = vmatpush.msra.mxu0 0.0
    %1455 = vmatpush.msra.mxu0 0.0
    %1456 = vmatpush.msra.mxu0 0.0
    %1457 = vmatpush.msra.mxu0 0.0
    %1458 = vmatpush.msra.mxu0 0.0
    %1459 = vmatpush.msra.mxu0 0.0
    %1460 = vmatpush.msra.mxu0 0.0
    %1461 = vmatpush.msra.mxu0 0.0
    %1462 = vmatpush.msra.mxu0 0.0
    %1463 = vmatpush.msra.mxu0 %v1443
    %1464 = vmatmul.f32.gmra.mxu0 %v1446
    %v1465 = vpop.f32.mrf.mxu0
    %v1466 = vadd.f32 0.0, %v1465
    %1467 = vdwg.mxu0
    %v1469 = vsel %vm146, %v1440, 0
    %v1472 = vsel %vm146, %v1466, 0
    %1474 = vmatpush.msra.mxu0 0.0
    %1475 = vmatpush.msra.mxu0 0.0
    %1476 = vmatpush.msra.mxu0 0.0
    %1477 = vmatpush.msra.mxu0 0.0
    %1478 = vmatpush.msra.mxu0 0.0
    %1479 = vmatpush.msra.mxu0 0.0
    %1480 = vmatpush.msra.mxu0 0.0
    %1481 = vmatpush.msra.mxu0 0.0
    %1482 = vmatpush.msra.mxu0 0.0
    %1483 = vmatpush.msra.mxu0 0.0
    %1484 = vmatpush.msra.mxu0 0.0
    %1485 = vmatpush.msra.mxu0 0.0
    %1486 = vmatpush.msra.mxu0 0.0
    %1487 = vmatpush.msra.mxu0 0.0
    %1488 = vmatpush.msra.mxu0 0.0
    %1489 = vmatpush.msra.mxu0 %v985
    %1490 = vmatmul.f32.gmra.mxu0 %v1469
    %v1491 = vpop.f32.mrf.mxu0
    %v1492 = vadd.f32 0.0, %v1491
    %1493 = vmatmul.f32.gmra.mxu0 %v1472
    %v1494 = vpop.f32.mrf.mxu0
    %v1495 = vadd.f32 0.0, %v1494
    %1496 = vdwg.mxu0
    %v1497 = vadd.f32 %v1333, %v1492
    %v1498 = vadd.f32 %v1336, %v1495
    %1499 = vrot.lane.b32.xlu0 %v1017, 104
    %v1500 = vpop.permute.xlu0 %1499
    %1501 = vrot.lane.b32.xlu0 %v1017, 72
    %v1502 = vpop.permute.xlu0 %1501
    %v1503 = vsel %vm146, %v1500, 0
    %v1505 = vsel %vm146, %v1502, 0
    %1507 = vmatpush.xpose.msra.mxu0 0.0
    %1508 = vmatpush.xpose.msra.mxu0 0.0
    %1509 = vmatpush.xpose.msra.mxu0 0.0
    %1510 = vmatpush.xpose.msra.mxu0 0.0
    %1511 = vmatpush.xpose.msra.mxu0 0.0
    %1512 = vmatpush.xpose.msra.mxu0 0.0
    %1513 = vmatpush.xpose.msra.mxu0 0.0
    %1514 = vmatpush.xpose.msra.mxu0 0.0
    %1515 = vmatpush.xpose.msra.mxu0 0.0
    %1516 = vmatpush.xpose.msra.mxu0 0.0
    %1517 = vmatpush.xpose.msra.mxu0 0.0
    %1518 = vmatpush.xpose.msra.mxu0 0.0
    %1519 = vmatpush.xpose.msra.mxu0 0.0
    %1520 = vmatpush.xpose.msra.mxu0 0.0
    %1521 = vmatpush.xpose.msra.mxu0 0.0
    %1522 = vmatpush.xpose.msra.mxu0 %v1505
    %1523 = vmatmul.f32.gmra.mxu0 %v1503
    %v1524 = vpop.f32.mrf.mxu0
    %v1525 = vadd.f32 %v139, %v1524
    %1526 = vdwg.mxu0
    %1527 = vrot.lane.b32.xlu0 %v1020, 104
    %v1528 = vpop.permute.xlu0 %1527
    %1529 = vrot.lane.b32.xlu0 %v1020, 72
    %v1530 = vpop.permute.xlu0 %1529
    %v1531 = vsel %vm146, %v1528, 0
    %v1533 = vsel %vm146, %v1530, 0
    %1535 = vmatpush.xpose.msra.mxu0 0.0
    %1536 = vmatpush.xpose.msra.mxu0 0.0
    %1537 = vmatpush.xpose.msra.mxu0 0.0
    %1538 = vmatpush.xpose.msra.mxu0 0.0
    %1539 = vmatpush.xpose.msra.mxu0 0.0
    %1540 = vmatpush.xpose.msra.mxu0 0.0
    %1541 = vmatpush.xpose.msra.mxu0 0.0
    %1542 = vmatpush.xpose.msra.mxu0 0.0
    %1543 = vmatpush.xpose.msra.mxu0 0.0
    %1544 = vmatpush.xpose.msra.mxu0 0.0
    %1545 = vmatpush.xpose.msra.mxu0 0.0
    %1546 = vmatpush.xpose.msra.mxu0 0.0
    %1547 = vmatpush.xpose.msra.mxu0 0.0
    %1548 = vmatpush.xpose.msra.mxu0 0.0
    %1549 = vmatpush.xpose.msra.mxu0 0.0
    %1550 = vmatpush.xpose.msra.mxu0 %v1533
    %1551 = vmatmul.f32.gmra.mxu0 %v1531
    %v1552 = vpop.f32.mrf.mxu0
    %v1553 = vadd.f32 %v140, %v1552
    %1554 = vdwg.mxu0
    %v1555 = vsel %vm146, %v1525, -inf
    %1556 = vmax.xlane.f32.xlu0 %v1555
    %v1557 = vpop.xlane.xlu0 %1556
    %v1558 = vsel %vm146, %v1553, -inf
    %1559 = vmax.xlane.f32.xlu0 %v1558
    %v1560 = vpop.xlane.xlu0 %1559
    %v1561 = vsub.f32 %v1525, %v1557
    %v1562 = vsub.f32 %v1553, %v1560
    %v1563 = vmul.f32 %v1561, 1.442695
    %v1564 = vpow.pop %v1563
    %v1565 = vmul.f32 %v1562, 1.442695
    %v1566 = vpow.pop %v1565
    %v1567 = vsel %vm146, %v1564, 0.0
    %1568 = vadd.xlane.f32.xlu0 %v1567
    %v1569 = vpop.xlane.xlu0 %1568
    %v1570 = vsel %vm146, %v1566, 0.0
    %1571 = vadd.xlane.f32.xlu0 %v1570
    %v1572 = vpop.xlane.xlu0 %1571
    %v1573 = vrcp.pop %v1569
    %v1574 = vrcp.pop %v1572
    %v1575 = vmul.f32 %v1564, %v1573
    %v1576 = vmul.f32 %v1566, %v1574
    %1577 = vrot.lane.b32.xlu0 %v1017, 40
    %v1578 = vpop.permute.xlu0 %1577
    %v1581 = vsel %vm146, %v1575, 0
    %1583 = vmatpush.msra.mxu0 0.0
    %1584 = vmatpush.msra.mxu0 0.0
    %1585 = vmatpush.msra.mxu0 0.0
    %1586 = vmatpush.msra.mxu0 0.0
    %1587 = vmatpush.msra.mxu0 0.0
    %1588 = vmatpush.msra.mxu0 0.0
    %1589 = vmatpush.msra.mxu0 0.0
    %1590 = vmatpush.msra.mxu0 0.0
    %1591 = vmatpush.msra.mxu0 0.0
    %1592 = vmatpush.msra.mxu0 0.0
    %1593 = vmatpush.msra.mxu0 0.0
    %1594 = vmatpush.msra.mxu0 0.0
    %1595 = vmatpush.msra.mxu0 0.0
    %1596 = vmatpush.msra.mxu0 0.0
    %1597 = vmatpush.msra.mxu0 0.0
    %1598 = vmatpush.msra.mxu0 %v1578
    %1599 = vmatmul.f32.gmra.mxu0 %v1581
    %v1600 = vpop.f32.mrf.mxu0
    %v1601 = vadd.f32 0.0, %v1600
    %1602 = vdwg.mxu0
    %1603 = vrot.lane.b32.xlu0 %v1020, 40
    %v1604 = vpop.permute.xlu0 %1603
    %v1607 = vsel %vm146, %v1576, 0
    %1609 = vmatpush.msra.mxu0 0.0
    %1610 = vmatpush.msra.mxu0 0.0
    %1611 = vmatpush.msra.mxu0 0.0
    %1612 = vmatpush.msra.mxu0 0.0
    %1613 = vmatpush.msra.mxu0 0.0
    %1614 = vmatpush.msra.mxu0 0.0
    %1615 = vmatpush.msra.mxu0 0.0
    %1616 = vmatpush.msra.mxu0 0.0
    %1617 = vmatpush.msra.mxu0 0.0
    %1618 = vmatpush.msra.mxu0 0.0
    %1619 = vmatpush.msra.mxu0 0.0
    %1620 = vmatpush.msra.mxu0 0.0
    %1621 = vmatpush.msra.mxu0 0.0
    %1622 = vmatpush.msra.mxu0 0.0
    %1623 = vmatpush.msra.mxu0 0.0
    %1624 = vmatpush.msra.mxu0 %v1604
    %1625 = vmatmul.f32.gmra.mxu0 %v1607
    %v1626 = vpop.f32.mrf.mxu0
    %v1627 = vadd.f32 0.0, %v1626
    %1628 = vdwg.mxu0
    %v1630 = vsel %vm146, %v1601, 0
    %v1633 = vsel %vm146, %v1627, 0
    %1635 = vmatpush.msra.mxu0 0.0
    %1636 = vmatpush.msra.mxu0 0.0
    %1637 = vmatpush.msra.mxu0 0.0
    %1638 = vmatpush.msra.mxu0 0.0
    %1639 = vmatpush.msra.mxu0 0.0
    %1640 = vmatpush.msra.mxu0 0.0
    %1641 = vmatpush.msra.mxu0 0.0
    %1642 = vmatpush.msra.mxu0 0.0
    %1643 = vmatpush.msra.mxu0 0.0
    %1644 = vmatpush.msra.mxu0 0.0
    %1645 = vmatpush.msra.mxu0 0.0
    %1646 = vmatpush.msra.mxu0 0.0
    %1647 = vmatpush.msra.mxu0 0.0
    %1648 = vmatpush.msra.mxu0 0.0
    %1649 = vmatpush.msra.mxu0 0.0
    %1650 = vmatpush.msra.mxu0 %v986
    %1651 = vmatmul.f32.gmra.mxu0 %v1630
    %v1652 = vpop.f32.mrf.mxu0
    %v1653 = vadd.f32 0.0, %v1652
    %1654 = vmatmul.f32.gmra.mxu0 %v1633
    %v1655 = vpop.f32.mrf.mxu0
    %v1656 = vadd.f32 0.0, %v1655
    %1657 = vdwg.mxu0
    %v1658 = vadd.f32 %v1497, %v1653
    %v1659 = vadd.f32 %v1498, %v1656
    %v1660 = vadd.f32 %v978, %v1658
    %v1661 = vadd.f32 %v979, %v1659
    %v1662 = vperm.slane %v981, 1
    %v1663 = vadd.f32 %v1660, %v1662
    %v1664 = vadd.f32 %v1661, %v1662
    %v1665 = vsel %vm39, %v1663, 0.0
    %1666 = vadd.xlane.f32.xlu0 %v1665
    %v1667 = vpop.xlane.xlu0 %1666
    %v1668 = vsel %vm39, %v1664, 0.0
    %1669 = vadd.xlane.f32.xlu0 %v1668
    %v1670 = vpop.xlane.xlu0 %1669
    %v1671 = vmul.f32 %v1667, %v52
    %v1672 = vmul.f32 %v1670, %v52
    %v1673 = vsub.f32 %v1663, %v1671
    %v1674 = vsub.f32 %v1664, %v1672
    %v1675 = vmul.f32 %v1673, %v1673
    %v1676 = vmul.f32 %v1674, %v1674
    %v1677 = vsel %vm39, %v1675, 0.0
    %1678 = vadd.xlane.f32.xlu0 %v1677
    %v1679 = vpop.xlane.xlu0 %1678
    %v1680 = vsel %vm39, %v1676, 0.0
    %1681 = vadd.xlane.f32.xlu0 %v1680
    %v1682 = vpop.xlane.xlu0 %1681
    %v1683 = vmul.f32 %v1679, %v52
    %v1684 = vmul.f32 %v1682, %v52
    %v1685 = vadd.f32 %v1683, 1e-05
    %v1686 = vadd.f32 %v1684, 1e-05
    %v1687 = vrsqrt.pop %v1685
    %v1688 = vmul.f32 %v1687, %v1685
    %v1689 = vmul.f32 %v1688, %v1687
    %v1690 = vmul.f32 0.5, %v1689
    %v1691 = vsub.f32 1.5, %v1690
    %v1692 = vmul.f32 %v1687, %v1691
    %vm1693 = vweird.f32 %v1685
    %vm1694 = vweird.f32 %v1687
    %vm1695 = vmor %vm1693, %vm1694
    %v1696 = vsel %vm1695, %v1687, %v1692
    %v1697 = vrsqrt.pop %v1686
    %v1698 = vmul.f32 %v1697, %v1686
    %v1699 = vmul.f32 %v1698, %v1697
    %v1700 = vmul.f32 0.5, %v1699
    %v1701 = vsub.f32 1.5, %v1700
    %v1702 = vmul.f32 %v1697, %v1701
    %vm1703 = vweird.f32 %v1686
    %vm1704 = vweird.f32 %v1697
    %vm1705 = vmor %vm1703, %vm1704
    %v1706 = vsel %vm1705, %v1697, %v1702
    %v1707 = vmul.f32 %v1673, %v1696
    %v1708 = vmul.f32 %v1674, %v1706
    %v1709 = vperm.slane %v981, 2
    %v1710 = vmul.f32 %v1707, %v1709
    %v1711 = vmul.f32 %v1708, %v1709
    %v1712 = vperm.slane %v981, 3
    %v1713 = vadd.f32 %v1710, %v1712
    %v1714 = vadd.f32 %v1711, %v1712
    %s1715 = scalar_lea.vmem %s5, 32
    %v1716 = vld [vmem:[%s1715] sm:$0xff]
    %v1717 = vld [vmem:[%s1715 + $0x8] sm:$0xff]
    %v1718 = vld [vmem:[%s1715 + $0x10] sm:$0xff]
    %v1719 = vld [vmem:[%s1715 + $0x18] sm:$0xff]
    %v1720 = vperm.slane %v981, 4
    %v1722 = vsel %vm39, %v1713, 0
    %v1725 = vsel %vm39, %v1714, 0
    %1727 = vmatpush.msra.mxu0 0.0
    %1728 = vmatpush.msra.mxu0 0.0
    %1729 = vmatpush.msra.mxu0 0.0
    %1730 = vmatpush.msra.mxu0 0.0
    %1731 = vmatpush.msra.mxu0 0.0
    %1732 = vmatpush.msra.mxu0 0.0
    %1733 = vmatpush.msra.mxu0 0.0
    %1734 = vmatpush.msra.mxu0 0.0
    %1735 = vmatpush.msra.mxu0 0.0
    %1736 = vmatpush.msra.mxu0 0.0
    %1737 = vmatpush.msra.mxu0 0.0
    %1738 = vmatpush.msra.mxu0 0.0
    %1739 = vmatpush.msra.mxu0 %v1719
    %1740 = vmatpush.msra.mxu0 %v1718
    %1741 = vmatpush.msra.mxu0 %v1717
    %1742 = vmatpush.msra.mxu0 %v1716
    %1743 = vmatmul.f32.gmra.mxu0 %v1722
    %v1744 = vpop.f32.mrf.mxu0
    %v1745 = vadd.f32 %v1720, %v1744
    %1746 = vmatmul.f32.gmra.mxu0 %v1725
    %v1747 = vpop.f32.mrf.mxu0
    %v1748 = vadd.f32 %v1720, %v1747
    %1749 = vdwg.mxu0
    %v1750 = vmul.f32 %v1745, 0.5
    %v1751 = vmul.f32 %v1748, 0.5
    %v1752 = vmul.f32 %v1745, 0.044715
    %v1753 = vmul.f32 %v1748, 0.044715
    %v1754 = vmul.f32 %v1752, %v1745
    %v1755 = vmul.f32 %v1753, %v1748
    %v1756 = vmul.f32 %v1754, %v1745
    %v1757 = vmul.f32 %v1755, %v1748
    %v1758 = vadd.f32 %v1745, %v1756
    %v1759 = vadd.f32 %v1748, %v1757
    %v1760 = vmul.f32 %v1758, 0.7978846
    %v1761 = vmul.f32 %v1759, 0.7978846
    %v1762 = vtanh.pop %v1760
    %v1763 = vtanh.pop %v1761
    %v1764 = vadd.f32 %v1762, 1.0
    %v1765 = vadd.f32 %v1763, 1.0
    %v1766 = vmul.f32 %v1750, %v1764
    %v1767 = vmul.f32 %v1751, %v1765
    %s1768 = scalar_lea.vmem %s6, 64
    %v1769 = vld [vmem:[%s1768] sm:$0xff]
    %v1770 = vld [vmem:[%s1768 + $0x8] sm:$0xff]
    %v1771 = vld [vmem:[%s1768 + $0x10] sm:$0xff]
    %v1772 = vld [vmem:[%s1768 + $0x18] sm:$0xff]
    %v1773 = vld [vmem:[%s1768 + $0x20] sm:$0xff]
    %v1774 = vld [vmem:[%s1768 + $0x28] sm:$0xff]
    %v1775 = vld [vmem:[%s1768 + $0x30] sm:$0xff]
    %v1776 = vld [vmem:[%s1768 + $0x38] sm:$0xff]
    %v1777 = vperm.slane %v981, 5
    %v1779 = vsel %vm898, %v1766, 0
    %v1782 = vsel %vm898, %v1767, 0
    %1784 = vmatpush.msra.mxu0 0.0
    %1785 = vmatpush.msra.mxu0 0.0
    %1786 = vmatpush.msra.mxu0 0.0
    %1787 = vmatpush.msra.mxu0 0.0
    %1788 = vmatpush.msra.mxu0 0.0
    %1789 = vmatpush.msra.mxu0 0.0
    %1790 = vmatpush.msra.mxu0 0.0
    %1791 = vmatpush.msra.mxu0 0.0
    %1792 = vmatpush.msra.mxu0 %v1776
    %1793 = vmatpush.msra.mxu0 %v1775
    %1794 = vmatpush.msra.mxu0 %v1774
    %1795 = vmatpush.msra.mxu0 %v1773
    %1796 = vmatpush.msra.mxu0 %v1772
    %1797 = vmatpush.msra.mxu0 %v1771
    %1798 = vmatpush.msra.mxu0 %v1770
    %1799 = vmatpush.msra.mxu0 %v1769
    %1800 = vmatmul.f32.gmra.mxu0 %v1779
    %v1801 = vpop.f32.mrf.mxu0
    %v1802 = vadd.f32 %v1777, %v1801
    %1803 = vmatmul.f32.gmra.mxu0 %v1782
    %v1804 = vpop.f32.mrf.mxu0
    %v1805 = vadd.f32 %v1777, %v1804
    %1806 = vdwg.mxu0
    %v1807 = vadd.f32 %v1713, %v1802
    %v1808 = vadd.f32 %v1714, %v1805
    %v1809 = vsel %vm39, %v1807, 0.0
    %1810 = vadd.xlane.f32.xlu0 %v1809
    %v1811 = vpop.xlane.xlu0 %1810
    %v1812 = vsel %vm39, %v1808, 0.0
    %1813 = vadd.xlane.f32.xlu0 %v1812
    %v1814 = vpop.xlane.xlu0 %1813
    %v1815 = vmul.f32 %v1811, %v52
    %v1816 = vmul.f32 %v1814, %v52
    %v1817 = vsub.f32 %v1807, %v1815
    %v1818 = vsub.f32 %v1808, %v1816
    %v1819 = vmul.f32 %v1817, %v1817
    %v1820 = vmul.f32 %v1818, %v1818
    %v1821 = vsel %vm39, %v1819, 0.0
    %1822 = vadd.xlane.f32.xlu0 %v1821
    %v1823 = vpop.xlane.xlu0 %1822
    %v1824 = vsel %vm39, %v1820, 0.0
    %1825 = vadd.xlane.f32.xlu0 %v1824
    %v1826 = vpop.xlane.xlu0 %1825
    %v1827 = vmul.f32 %v1823, %v52
    %v1828 = vmul.f32 %v1826, %v52
    %v1829 = vadd.f32 %v1827, 1e-05
    %v1830 = vadd.f32 %v1828, 1e-05
    %v1831 = vrsqrt.pop %v1829
    %v1832 = vmul.f32 %v1831, %v1829
    %v1833 = vmul.f32 %v1832, %v1831
    %v1834 = vmul.f32 0.5, %v1833
    %v1835 = vsub.f32 1.5, %v1834
    %v1836 = vmul.f32 %v1831, %v1835
    %vm1837 = vweird.f32 %v1829
    %vm1838 = vweird.f32 %v1831
    %vm1839 = vmor %vm1837, %vm1838
    %v1840 = vsel %vm1839, %v1831, %v1836
    %v1841 = vrsqrt.pop %v1830
    %v1842 = vmul.f32 %v1841, %v1830
    %v1843 = vmul.f32 %v1842, %v1841
    %v1844 = vmul.f32 0.5, %v1843
    %v1845 = vsub.f32 1.5, %v1844
    %v1846 = vmul.f32 %v1841, %v1845
    %vm1847 = vweird.f32 %v1830
    %vm1848 = vweird.f32 %v1841
    %vm1849 = vmor %vm1847, %vm1848
    %v1850 = vsel %vm1849, %v1841, %v1846
    %v1851 = vmul.f32 %v1817, %v1840
    %v1852 = vmul.f32 %v1818, %v1850
    %v1853 = vperm.slane %v981, 6
    %v1854 = vmul.f32 %v1851, %v1853
    %v1855 = vmul.f32 %v1852, %v1853
    %v1856 = vperm.slane %v981, 7
    %v1857 = vadd.f32 %v1854, %v1856
    %v1858 = vadd.f32 %v1855, %v1856
    %v1859 = vld [vmem:[%s8] sm:$0xff]
    %v1860 = vld [vmem:[%s8 + $0x8] sm:$0xff]
    %v1861 = vld [vmem:[%s8 + $0x10] sm:$0xff]
    %v1862 = vld [vmem:[%s8 + $0x18] sm:$0xff]
    %v1863 = vperm.slane %v36, 2
    %v1866 = vrot.slane %v1858, 7
    %vm1867 = vcmask 1041409
    %v1868 = vsel %vm1867, %v1866, %v1857
    %v1869 = vsel %vm39, %v1868, 0
    %1871 = vmatpush.msra.mxu0 0.0
    %1872 = vmatpush.msra.mxu0 0.0
    %1873 = vmatpush.msra.mxu0 0.0
    %1874 = vmatpush.msra.mxu0 0.0
    %1875 = vmatpush.msra.mxu0 0.0
    %1876 = vmatpush.msra.mxu0 0.0
    %1877 = vmatpush.msra.mxu0 0.0
    %1878 = vmatpush.msra.mxu0 0.0
    %1879 = vmatpush.msra.mxu0 0.0
    %1880 = vmatpush.msra.mxu0 0.0
    %1881 = vmatpush.msra.mxu0 0.0
    %1882 = vmatpush.msra.mxu0 0.0
    %1883 = vmatpush.msra.mxu0 %v1862
    %1884 = vmatpush.msra.mxu0 %v1861
    %1885 = vmatpush.msra.mxu0 %v1860
    %1886 = vmatpush.msra.mxu0 %v1859
    %1887 = vmatmul.f32.gmra.mxu0 %v1869
    %v1888 = vpop.f32.mrf.mxu0
    %v1889 = vadd.f32 %v1863, %v1888
    %1890 = vdwg.mxu0
    %v1891 = vtanh.pop %v1889
    %v1892 = vld [vmem:[%s9] sm:$0xff]
    %v1893 = vld [vmem:[%s9 + $0x8] sm:$0xff]
    %v1894 = vld [vmem:[%s9 + $0x10] sm:$0xff]
    %v1895 = vld [vmem:[%s9 + $0x18] sm:$0xff]
    %v1896 = vperm.slane %v36, 3
    %v1898 = vsel %vm39, %v1891, 0
    %1900 = vmatpush.msra.mxu0 0.0
    %1901 = vmatpush.msra.mxu0 0.0
    %1902 = vmatpush.msra.mxu0 0.0
    %1903 = vmatpush.msra.mxu0 0.0
    %1904 = vmatpush.msra.mxu0 0.0
    %1905 = vmatpush.msra.mxu0 0.0
    %1906 = vmatpush.msra.mxu0 0.0
    %1907 = vmatpush.msra.mxu0 0.0
    %1908 = vmatpush.msra.mxu0 0.0
    %1909 = vmatpush.msra.mxu0 0.0
    %1910 = vmatpush.msra.mxu0 0.0
    %1911 = vmatpush.msra.mxu0 0.0
    %1912 = vmatpush.msra.mxu0 %v1895
    %1913 = vmatpush.msra.mxu0 %v1894
    %1914 = vmatpush.msra.mxu0 %v1893
    %1915 = vmatpush.msra.mxu0 %v1892
    %1916 = vmatmul.f32.gmra.mxu0 %v1898
    %v1917 = vpop.f32.mrf.mxu0
    %v1918 = vadd.f32 %v1896, %v1917
    %1919 = vdwg.mxu0
    %1920 = vst [vmem:[#allocation2] sm:$0x3] %v1918
    // Predicated region
    $region42: #{relation_extraction_forward.1} parent=1 // pred_check
      _
    $region43: #{relation_extraction_forward.1} parent=1 // pred_check_branch
      %1922 = sbr.rel (0) target = $region45
    $region44: #{relation_extraction_forward.1} parent=1 // pred_region
      %1924 = vsyncadd [#allocation3], 0
      %s1926 = sshll.u32 [#allocation2], 4
      %s1927 = int_to_ptr.vmem [resolvable:$true] %s1926
      %s1928 = sshll.u32 %s10, 4
      %s1929 = int_to_ptr.hbm [resolvable:$true] %s1928
      %1931 = dma.vmem_to_hbm [thread:$0]  %s1927, 32, %s1929, [#allocation3]
    $region45: #{relation_extraction_forward.1} parent=1 // pred_fallthru
      _
    // Predicated region
    $region46: #{relation_extraction_forward.1} parent=1 // pred_check
      _
    $region47: #{relation_extraction_forward.1} parent=1 // pred_check_branch
      %1933 = sbr.rel (0) target = $region49
    $region48: #{relation_extraction_forward.1} parent=1 // pred_region
      %1935 = dma.done [#allocation3], 32
    $region49: #{relation_extraction_forward.1} parent=1 // pred_fallthru
      _
    %1936 = vsyncpa [#allocation3], 1

</llo_original>
